<compile_context>
chip_gen: v7x
topology: tpu7x:2x2x1
jax: 0.10.0
libtpu: 0.0.40
codegen_flags: <defaults>
</compile_context>

<pallas_src>
import functools
import math

import jax
import jax.numpy as jnp
import numpy as np
from jax.experimental import pallas as pl
from jax.experimental.pallas import tpu as pltpu

_OUT_PAD = 128  # lane-dense padded head output width


def _grumlp_kernel(
    x_ref,      # (T*B, D)   time-major flattened input (row t*B + b == x[b, t])
    w_i_ref,    # (D, 3H)    [W_ir | W_iz | W_in]
    w_h_ref,    # (H, 3H)    [W_hr | W_hz | W_hn]
    b_g_ref,    # (1, 3H)    [b_ir+b_hr | b_iz+b_hz | b_in]
    b_hn_ref,   # (1, H)
    w1_ref,     # (H, hidden)
    b1_ref,     # (1, hidden)
    w2_ref,     # (hidden, OUT_PAD)   zero-padded
    b2_ref,     # (1, OUT_PAD)        zero-padded
    out_ref,    # (T*B, OUT_PAD)
    hs_ref,     # VMEM scratch (T*B, H) — staged hidden states for the head
    *,
    T: int,
    B: int,
    H: int,
    tanh_out: bool,
):
    f32 = jnp.float32

    # ---- Prologue: hoisted input-path GEMM over ALL timesteps (one MXU call),
    # with all constant input/recurrent r,z biases + b_in already folded in.
    xg = (
        jnp.dot(x_ref[...], w_i_ref[...], preferred_element_type=f32)
        + b_g_ref[...]
    )  # (T*B, 3H)

    # Hoist loop-invariant loads / broadcasts out of the unrolled loop
    # (JAX does not CSE broadcast_in_dim).
    w_h = w_h_ref[...]                                    # (H, 3H)
    b_hn = jnp.broadcast_to(b_hn_ref[...], (B, H))        # (B, H)

    # ---- Recurrence: fully unrolled (T is small & static); h is a value.
    # PyTorch GRU gate order [r, z, n]:
    #   r  = sigmoid(W_ir x + b_ir + W_hr h + b_hr)
    #   z  = sigmoid(W_iz x + b_iz + W_hz h + b_hz)
    #   n  = tanh  (W_in x + b_in + r * (W_hn h + b_hn))
    #   h' = (1 - z) * n + z * h
    h = jnp.zeros((B, H), f32)
    for t in range(T):
        xg_t = xg[t * B:(t + 1) * B, :]                        # (B, 3H) static slice
        hg = jnp.dot(h, w_h, preferred_element_type=f32)       # (B, 3H) one MXU call
        r = jax.nn.sigmoid(xg_t[:, 0 * H:1 * H] + hg[:, 0 * H:1 * H])
        z = jax.nn.sigmoid(xg_t[:, 1 * H:2 * H] + hg[:, 1 * H:2 * H])
        n = jnp.tanh(xg_t[:, 2 * H:3 * H] + r * (hg[:, 2 * H:3 * H] + b_hn))
        h = (1.0 - z) * n + z * h
        hs_ref[t * B:(t + 1) * B, :] = h                       # stage for the head

    # ---- Epilogue: batched MLP head over all T*B rows, lane-dense output.
    hs = hs_ref[...]                                           # (T*B, H)
    hid = jnp.maximum(
        jnp.dot(hs, w1_ref[...], preferred_element_type=f32) + b1_ref[...], 0.0
    )                                                          # (T*B, hidden)
    y = jnp.dot(hid, w2_ref[...], preferred_element_type=f32) + b2_ref[...]
    if tanh_out:
        y = jnp.tanh(y)
    out_ref[...] = y.astype(out_ref.dtype)                     # single unmasked store


@functools.partial(jax.jit, static_argnames=("last_layer_activation",))
def grumlp_forward(x, params, *, last_layer_activation="none"):
    """x: (B, T, input_size) float32 (batch_first). Returns (B, T, output_size)."""
    B, T, D = x.shape
    H = params["w_hr"].shape[0]
    hidden = params["w1"].shape[1]
    out_dim = params["w2"].shape[1]

    # Time-major flatten so the prologue input GEMM and the head operate on one
    # contiguous (T*B, .) slab: row t*B + b == x[b, t, :].
    x_flat = jnp.transpose(x, (1, 0, 2)).reshape(T * B, D)

    # Fuse gate weights (PyTorch gate order [r, z, n]) and fold biases.
    w_i = jnp.concatenate([params["w_ir"], params["w_iz"], params["w_in"]], axis=1)
    w_h = jnp.concatenate([params["w_hr"], params["w_hz"], params["w_hn"]], axis=1)
    b_g = jnp.concatenate(
        [params["b_ir"] + params["b_hr"],
         params["b_iz"] + params["b_hz"],
         params["b_in"]],
        axis=1,
    )

    # Zero-pad the head output dim to a full 128-lane vreg (lane-dense store).
    w2p = jnp.zeros((hidden, _OUT_PAD), jnp.float32).at[:, :out_dim].set(params["w2"])
    b2p = jnp.zeros((1, _OUT_PAD), jnp.float32).at[:, :out_dim].set(params["b2"])

    kernel = functools.partial(
        _grumlp_kernel, T=T, B=B, H=H,
        tanh_out=(last_layer_activation == "tanh"),
    )

    vmem = pl.BlockSpec(memory_space=pltpu.MemorySpace.VMEM)
    y_pad = pl.pallas_call(
        kernel,
        out_shape=jax.ShapeDtypeStruct((T * B, _OUT_PAD), jnp.float32),
        in_specs=[vmem] * 9,
        out_specs=vmem,
        scratch_shapes=[pltpu.VMEM((T * B, H), jnp.float32)],
    )(x_flat, w_i, w_h, b_g, params["b_hn"], params["w1"], params["b1"], w2p, b2p)

    # Undo the lane padding and return batch-major (B, T, out).
    y = y_pad[:, :out_dim].reshape(T, B, out_dim)
    return jnp.transpose(y, (1, 0, 2))


def init_params(key, input_size, hidden_size, output_size, gru_hidden_size):
    """Deterministic init mirroring PyTorch parameter shapes.

    nn.GRU: weight_ih_l0 (3H, D), weight_hh_l0 (3H, H), bias_ih_l0 (3H,),
            bias_hh_l0 (3H,), gate order [r, z, n].
    Per-gate slices are stored transposed (D, H)/(H, H) so the kernel does
    x @ W with the contraction on the last input dim.
    """
    D, H = input_size, gru_hidden_size
    ks = jax.random.split(key, 10)
    k_gru = 1.0 / math.sqrt(H)
    k_fc1 = 1.0 / math.sqrt(H)
    k_fc2 = 1.0 / math.sqrt(hidden_size)

    def u(k, shape, scale):
        return jax.random.uniform(k, shape, jnp.float32, -scale, scale)

    w_ih = u(ks[0], (3 * H, D), k_gru)   # [r; z; n] stacked, PyTorch layout
    w_hh = u(ks[1], (3 * H, H), k_gru)
    b_ih = u(ks[2], (3 * H,), k_gru)
    b_hh = u(ks[3], (3 * H,), k_gru)

    params = {
        "w_ir": w_ih[0 * H:1 * H].T, "w_iz": w_ih[1 * H:2 * H].T, "w_in": w_ih[2 * H:3 * H].T,
        "w_hr": w_hh[0 * H:1 * H].T, "w_hz": w_hh[1 * H:2 * H].T, "w_hn": w_hh[2 * H:3 * H].T,
        "b_ir": b_ih[0 * H:1 * H][None, :], "b_iz": b_ih[1 * H:2 * H][None, :], "b_in": b_ih[2 * H:3 * H][None, :],
        "b_hr": b_hh[0 * H:1 * H][None, :], "b_hz": b_hh[1 * H:2 * H][None, :], "b_hn": b_hh[2 * H:3 * H][None, :],
        "w1": u(ks[4], (hidden_size, H), k_fc1).T,             # (H, hidden)
        "b1": u(ks[5], (hidden_size,), k_fc1)[None, :],
        "w2": u(ks[6], (output_size, hidden_size), k_fc2).T,   # (hidden, out)
        "b2": u(ks[7], (output_size,), k_fc2)[None, :],
    }
    return params


def grumlp_reference(x, params, *, last_layer_activation="none"):
    """Pure-JAX reference of the same forward (for validation)."""
    def step(h, x_t):
        r = jax.nn.sigmoid(x_t @ params["w_ir"] + params["b_ir"]
                           + h @ params["w_hr"] + params["b_hr"])
        z = jax.nn.sigmoid(x_t @ params["w_iz"] + params["b_iz"]
                           + h @ params["w_hz"] + params["b_hz"])
        n = jnp.tanh(x_t @ params["w_in"] + params["b_in"]
                     + r * (h @ params["w_hn"] + params["b_hn"]))
        h_new = (1.0 - z) * n + z * h
        return h_new, h_new

    B, T, D = x.shape
    H = params["w_hr"].shape[0]
    h0 = jnp.zeros((B, H), jnp.float32)
    _, hs = jax.lax.scan(step, h0, jnp.transpose(x, (1, 0, 2)))  # (T, B, H)
    hs = jnp.transpose(hs, (1, 0, 2))                            # (B, T, H)
    hid = jnp.maximum(hs @ params["w1"] + params["b1"], 0.0)
    y = hid @ params["w2"] + params["b2"]
    if last_layer_activation == "tanh":
        y = jnp.tanh(y)
    return y


if __name__ == "__main__":
    # GRUMLP(input_size=6, hidden_size=64, output_size=5, gru_hidden_size=32)
    input_size, hidden_size, output_size, gru_hidden_size = 6, 64, 5, 32
    B, T = 2, 8

    key = jax.random.PRNGKey(0)
    k_x, k_p = jax.random.split(key)
    x = jax.random.normal(k_x, (B, T, input_size), jnp.float32)
    params = init_params(k_p, input_size, hidden_size, output_size, gru_hidden_size)

    for act in ("none", "tanh"):
        out = jax.block_until_ready(
            grumlp_forward(x, params, last_layer_activation=act))
        ref = jax.block_until_ready(
            grumlp_reference(x, params, last_layer_activation=act))
        assert out.shape == (B, T, output_size)
        np.testing.assert_allclose(np.asarray(out), np.asarray(ref),
                                   rtol=1e-5, atol=1e-5)

    print("KERNEL_OK")
</pallas_src>

<mosaic_0001>
module attributes {stable_mosaic.version = 11 : i64} {
  func.func @_grumlp_kernel(%arg0: memref<16x6xf32, #tpu.memory_space<vmem>>, %arg1: memref<6x96xf32, #tpu.memory_space<vmem>>, %arg2: memref<32x96xf32, #tpu.memory_space<vmem>>, %arg3: memref<1x96xf32, #tpu.memory_space<vmem>>, %arg4: memref<1x32xf32, #tpu.memory_space<vmem>>, %arg5: memref<32x64xf32, #tpu.memory_space<vmem>>, %arg6: memref<1x64xf32, #tpu.memory_space<vmem>>, %arg7: memref<64x128xf32, #tpu.memory_space<vmem>>, %arg8: memref<1x128xf32, #tpu.memory_space<vmem>>, %arg9: memref<16x128xf32, #tpu.memory_space<vmem>>, %arg10: memref<16x32xf32, #tpu.memory_space<vmem>>) attributes {dimension_semantics = [], scalar_prefetch = 0 : i64, scratch_operands = 1 : i64, tpu.core_type = #tpu.core_type<tc>} {
    %c0 = arith.constant 0 : index
    %c0_0 = arith.constant 0 : index
    %0 = vector.load %arg0[%c0, %c0_0] : memref<16x6xf32, #tpu.memory_space<vmem>>, vector<16x6xf32>
    %c0_1 = arith.constant 0 : index
    %c0_2 = arith.constant 0 : index
    %1 = vector.load %arg1[%c0_1, %c0_2] : memref<6x96xf32, #tpu.memory_space<vmem>>, vector<6x96xf32>
    %cst = arith.constant dense<0.000000e+00> : vector<16x96xf32>
    %2 = tpu.matmul %0, %1, %cst {dimension_numbers = #tpu.dot_dimension_numbers<[1], [0], [0], [1], [0, 0, 1, 1], [], []>} : vector<16x6xf32>, vector<6x96xf32>, vector<16x96xf32> -> vector<16x96xf32>
    %c0_3 = arith.constant 0 : index
    %c0_4 = arith.constant 0 : index
    %3 = vector.load %arg3[%c0_3, %c0_4] : memref<1x96xf32, #tpu.memory_space<vmem>>, vector<1x96xf32>
    %4 = vector.broadcast %3 : vector<1x96xf32> to vector<16x96xf32>
    %5 = arith.addf %2, %4 : vector<16x96xf32>
    %c0_5 = arith.constant 0 : index
    %c0_6 = arith.constant 0 : index
    %6 = vector.load %arg2[%c0_5, %c0_6] : memref<32x96xf32, #tpu.memory_space<vmem>>, vector<32x96xf32>
    %c0_7 = arith.constant 0 : index
    %c0_8 = arith.constant 0 : index
    %7 = vector.load %arg4[%c0_7, %c0_8] : memref<1x32xf32, #tpu.memory_space<vmem>>, vector<1x32xf32>
    %8 = vector.shape_cast %7 : vector<1x32xf32> to vector<1x32xf32>
    %9 = vector.broadcast %8 : vector<1x32xf32> to vector<2x32xf32>
    %cst_9 = arith.constant 0.000000e+00 : f32
    %10 = vector.broadcast %cst_9 : f32 to vector<2x32xf32>
    %11 = vector.extract_strided_slice %5 {offsets = [0, 0], sizes = [2, 96], strides = [1, 1]} : vector<16x96xf32> to vector<2x96xf32>
    %cst_10 = arith.constant dense<0.000000e+00> : vector<2x96xf32>
    %12 = tpu.matmul %10, %6, %cst_10 {dimension_numbers = #tpu.dot_dimension_numbers<[1], [0], [0], [1], [0, 0, 1, 1], [], []>} : vector<2x32xf32>, vector<32x96xf32>, vector<2x96xf32> -> vector<2x96xf32>
    %13 = vector.extract_strided_slice %11 {offsets = [0, 0], sizes = [2, 32], strides = [1, 1]} : vector<2x96xf32> to vector<2x32xf32>
    %14 = vector.extract_strided_slice %12 {offsets = [0, 0], sizes = [2, 32], strides = [1, 1]} : vector<2x96xf32> to vector<2x32xf32>
    %15 = arith.addf %13, %14 : vector<2x32xf32>
    %16 = arith.negf %15 : vector<2x32xf32>
    %17 = math.exp %16 : vector<2x32xf32>
    %cst_11 = arith.constant 1.000000e+00 : f32
    %18 = vector.broadcast %cst_11 : f32 to vector<2x32xf32>
    %19 = arith.addf %18, %17 : vector<2x32xf32>
    %20 = arith.divf %18, %19 : vector<2x32xf32>
    %21 = vector.extract_strided_slice %11 {offsets = [0, 32], sizes = [2, 32], strides = [1, 1]} : vector<2x96xf32> to vector<2x32xf32>
    %22 = vector.extract_strided_slice %12 {offsets = [0, 32], sizes = [2, 32], strides = [1, 1]} : vector<2x96xf32> to vector<2x32xf32>
    %23 = arith.addf %21, %22 : vector<2x32xf32>
    %24 = arith.negf %23 : vector<2x32xf32>
    %25 = math.exp %24 : vector<2x32xf32>
    %cst_12 = arith.constant 1.000000e+00 : f32
    %26 = vector.broadcast %cst_12 : f32 to vector<2x32xf32>
    %27 = arith.addf %26, %25 : vector<2x32xf32>
    %28 = arith.divf %26, %27 : vector<2x32xf32>
    %29 = vector.extract_strided_slice %11 {offsets = [0, 64], sizes = [2, 32], strides = [1, 1]} : vector<2x96xf32> to vector<2x32xf32>
    %30 = vector.extract_strided_slice %12 {offsets = [0, 64], sizes = [2, 32], strides = [1, 1]} : vector<2x96xf32> to vector<2x32xf32>
    %31 = arith.addf %30, %9 : vector<2x32xf32>
    %32 = arith.mulf %20, %31 : vector<2x32xf32>
    %33 = arith.addf %29, %32 : vector<2x32xf32>
    %34 = math.tanh %33 : vector<2x32xf32>
    %cst_13 = arith.constant 1.000000e+00 : f32
    %35 = vector.broadcast %cst_13 : f32 to vector<2x32xf32>
    %36 = arith.subf %35, %28 : vector<2x32xf32>
    %37 = arith.mulf %36, %34 : vector<2x32xf32>
    %38 = arith.mulf %28, %10 : vector<2x32xf32>
    %39 = arith.addf %37, %38 : vector<2x32xf32>
    %c0_14 = arith.constant 0 : index
    %c0_15 = arith.constant 0 : index
    %40 = vector.load %arg10[%c0_14, %c0_15] : memref<16x32xf32, #tpu.memory_space<vmem>>, vector<2x32xf32>
    tpu.vector_store %arg10[%c0_14, %c0_15], %39 {strides = array<i32>} : memref<16x32xf32, #tpu.memory_space<vmem>>, vector<2x32xf32>,
    %41 = vector.extract_strided_slice %5 {offsets = [2, 0], sizes = [2, 96], strides = [1, 1]} : vector<16x96xf32> to vector<2x96xf32>
    %cst_16 = arith.constant dense<0.000000e+00> : vector<2x96xf32>
    %42 = tpu.matmul %39, %6, %cst_16 {dimension_numbers = #tpu.dot_dimension_numbers<[1], [0], [0], [1], [0, 0, 1, 1], [], []>} : vector<2x32xf32>, vector<32x96xf32>, vector<2x96xf32> -> vector<2x96xf32>
    %43 = vector.extract_strided_slice %41 {offsets = [0, 0], sizes = [2, 32], strides = [1, 1]} : vector<2x96xf32> to vector<2x32xf32>
    %44 = vector.extract_strided_slice %42 {offsets = [0, 0], sizes = [2, 32], strides = [1, 1]} : vector<2x96xf32> to vector<2x32xf32>
    %45 = arith.addf %43, %44 : vector<2x32xf32>
    %46 = arith.negf %45 : vector<2x32xf32>
    %47 = math.exp %46 : vector<2x32xf32>
    %cst_17 = arith.constant 1.000000e+00 : f32
    %48 = vector.broadcast %cst_17 : f32 to vector<2x32xf32>
    %49 = arith.addf %48, %47 : vector<2x32xf32>
    %50 = arith.divf %48, %49 : vector<2x32xf32>
    %51 = vector.extract_strided_slice %41 {offsets = [0, 32], sizes = [2, 32], strides = [1, 1]} : vector<2x96xf32> to vector<2x32xf32>
    %52 = vector.extract_strided_slice %42 {offsets = [0, 32], sizes = [2, 32], strides = [1, 1]} : vector<2x96xf32> to vector<2x32xf32>
    %53 = arith.addf %51, %52 : vector<2x32xf32>
    %54 = arith.negf %53 : vector<2x32xf32>
    %55 = math.exp %54 : vector<2x32xf32>
    %cst_18 = arith.constant 1.000000e+00 : f32
    %56 = vector.broadcast %cst_18 : f32 to vector<2x32xf32>
    %57 = arith.addf %56, %55 : vector<2x32xf32>
    %58 = arith.divf %56, %57 : vector<2x32xf32>
    %59 = vector.extract_strided_slice %41 {offsets = [0, 64], sizes = [2, 32], strides = [1, 1]} : vector<2x96xf32> to vector<2x32xf32>
    %60 = vector.extract_strided_slice %42 {offsets = [0, 64], sizes = [2, 32], strides = [1, 1]} : vector<2x96xf32> to vector<2x32xf32>
    %61 = arith.addf %60, %9 : vector<2x32xf32>
    %62 = arith.mulf %50, %61 : vector<2x32xf32>
    %63 = arith.addf %59, %62 : vector<2x32xf32>
    %64 = math.tanh %63 : vector<2x32xf32>
    %cst_19 = arith.constant 1.000000e+00 : f32
    %65 = vector.broadcast %cst_19 : f32 to vector<2x32xf32>
    %66 = arith.subf %65, %58 : vector<2x32xf32>
    %67 = arith.mulf %66, %64 : vector<2x32xf32>
    %68 = arith.mulf %58, %39 : vector<2x32xf32>
    %69 = arith.addf %67, %68 : vector<2x32xf32>
    %c2 = arith.constant 2 : index
    %c0_20 = arith.constant 0 : index
    %70 = vector.load %arg10[%c2, %c0_20] : memref<16x32xf32, #tpu.memory_space<vmem>>, vector<2x32xf32>
    tpu.vector_store %arg10[%c2, %c0_20], %69 {strides = array<i32>} : memref<16x32xf32, #tpu.memory_space<vmem>>, vector<2x32xf32>,
    %71 = vector.extract_strided_slice %5 {offsets = [4, 0], sizes = [2, 96], strides = [1, 1]} : vector<16x96xf32> to vector<2x96xf32>
    %cst_21 = arith.constant dense<0.000000e+00> : vector<2x96xf32>
    %72 = tpu.matmul %69, %6, %cst_21 {dimension_numbers = #tpu.dot_dimension_numbers<[1], [0], [0], [1], [0, 0, 1, 1], [], []>} : vector<2x32xf32>, vector<32x96xf32>, vector<2x96xf32> -> vector<2x96xf32>
    %73 = vector.extract_strided_slice %71 {offsets = [0, 0], sizes = [2, 32], strides = [1, 1]} : vector<2x96xf32> to vector<2x32xf32>
    %74 = vector.extract_strided_slice %72 {offsets = [0, 0], sizes = [2, 32], strides = [1, 1]} : vector<2x96xf32> to vector<2x32xf32>
    %75 = arith.addf %73, %74 : vector<2x32xf32>
    %76 = arith.negf %75 : vector<2x32xf32>
    %77 = math.exp %76 : vector<2x32xf32>
    %cst_22 = arith.constant 1.000000e+00 : f32
    %78 = vector.broadcast %cst_22 : f32 to vector<2x32xf32>
    %79 = arith.addf %78, %77 : vector<2x32xf32>
    %80 = arith.divf %78, %79 : vector<2x32xf32>
    %81 = vector.extract_strided_slice %71 {offsets = [0, 32], sizes = [2, 32], strides = [1, 1]} : vector<2x96xf32> to vector<2x32xf32>
    %82 = vector.extract_strided_slice %72 {offsets = [0, 32], sizes = [2, 32], strides = [1, 1]} : vector<2x96xf32> to vector<2x32xf32>
    %83 = arith.addf %81, %82 : vector<2x32xf32>
    %84 = arith.negf %83 : vector<2x32xf32>
    %85 = math.exp %84 : vector<2x32xf32>
    %cst_23 = arith.constant 1.000000e+00 : f32
    %86 = vector.broadcast %cst_23 : f32 to vector<2x32xf32>
    %87 = arith.addf %86, %85 : vector<2x32xf32>
    %88 = arith.divf %86, %87 : vector<2x32xf32>
    %89 = vector.extract_strided_slice %71 {offsets = [0, 64], sizes = [2, 32], strides = [1, 1]} : vector<2x96xf32> to vector<2x32xf32>
    %90 = vector.extract_strided_slice %72 {offsets = [0, 64], sizes = [2, 32], strides = [1, 1]} : vector<2x96xf32> to vector<2x32xf32>
    %91 = arith.addf %90, %9 : vector<2x32xf32>
    %92 = arith.mulf %80, %91 : vector<2x32xf32>
    %93 = arith.addf %89, %92 : vector<2x32xf32>
    %94 = math.tanh %93 : vector<2x32xf32>
    %cst_24 = arith.constant 1.000000e+00 : f32
    %95 = vector.broadcast %cst_24 : f32 to vector<2x32xf32>
    %96 = arith.subf %95, %88 : vector<2x32xf32>
    %97 = arith.mulf %96, %94 : vector<2x32xf32>
    %98 = arith.mulf %88, %69 : vector<2x32xf32>
    %99 = arith.addf %97, %98 : vector<2x32xf32>
    %c4 = arith.constant 4 : index
    %c0_25 = arith.constant 0 : index
    %100 = vector.load %arg10[%c4, %c0_25] : memref<16x32xf32, #tpu.memory_space<vmem>>, vector<2x32xf32>
    tpu.vector_store %arg10[%c4, %c0_25], %99 {strides = array<i32>} : memref<16x32xf32, #tpu.memory_space<vmem>>, vector<2x32xf32>,
    %101 = vector.extract_strided_slice %5 {offsets = [6, 0], sizes = [2, 96], strides = [1, 1]} : vector<16x96xf32> to vector<2x96xf32>
    %cst_26 = arith.constant dense<0.000000e+00> : vector<2x96xf32>
    %102 = tpu.matmul %99, %6, %cst_26 {dimension_numbers = #tpu.dot_dimension_numbers<[1], [0], [0], [1], [0, 0, 1, 1], [], []>} : vector<2x32xf32>, vector<32x96xf32>, vector<2x96xf32> -> vector<2x96xf32>
    %103 = vector.extract_strided_slice %101 {offsets = [0, 0], sizes = [2, 32], strides = [1, 1]} : vector<2x96xf32> to vector<2x32xf32>
    %104 = vector.extract_strided_slice %102 {offsets = [0, 0], sizes = [2, 32], strides = [1, 1]} : vector<2x96xf32> to vector<2x32xf32>
    %105 = arith.addf %103, %104 : vector<2x32xf32>
    %106 = arith.negf %105 : vector<2x32xf32>
    %107 = math.exp %106 : vector<2x32xf32>
    %cst_27 = arith.constant 1.000000e+00 : f32
    %108 = vector.broadcast %cst_27 : f32 to vector<2x32xf32>
    %109 = arith.addf %108, %107 : vector<2x32xf32>
    %110 = arith.divf %108, %109 : vector<2x32xf32>
    %111 = vector.extract_strided_slice %101 {offsets = [0, 32], sizes = [2, 32], strides = [1, 1]} : vector<2x96xf32> to vector<2x32xf32>
    %112 = vector.extract_strided_slice %102 {offsets = [0, 32], sizes = [2, 32], strides = [1, 1]} : vector<2x96xf32> to vector<2x32xf32>
    %113 = arith.addf %111, %112 : vector<2x32xf32>
    %114 = arith.negf %113 : vector<2x32xf32>
    %115 = math.exp %114 : vector<2x32xf32>
    %cst_28 = arith.constant 1.000000e+00 : f32
    %116 = vector.broadcast %cst_28 : f32 to vector<2x32xf32>
    %117 = arith.addf %116, %115 : vector<2x32xf32>
    %118 = arith.divf %116, %117 : vector<2x32xf32>
    %119 = vector.extract_strided_slice %101 {offsets = [0, 64], sizes = [2, 32], strides = [1, 1]} : vector<2x96xf32> to vector<2x32xf32>
    %120 = vector.extract_strided_slice %102 {offsets = [0, 64], sizes = [2, 32], strides = [1, 1]} : vector<2x96xf32> to vector<2x32xf32>
    %121 = arith.addf %120, %9 : vector<2x32xf32>
    %122 = arith.mulf %110, %121 : vector<2x32xf32>
    %123 = arith.addf %119, %122 : vector<2x32xf32>
    %124 = math.tanh %123 : vector<2x32xf32>
    %cst_29 = arith.constant 1.000000e+00 : f32
    %125 = vector.broadcast %cst_29 : f32 to vector<2x32xf32>
    %126 = arith.subf %125, %118 : vector<2x32xf32>
    %127 = arith.mulf %126, %124 : vector<2x32xf32>
    %128 = arith.mulf %118, %99 : vector<2x32xf32>
    %129 = arith.addf %127, %128 : vector<2x32xf32>
    %c6 = arith.constant 6 : index
    %c0_30 = arith.constant 0 : index
    %130 = vector.load %arg10[%c6, %c0_30] : memref<16x32xf32, #tpu.memory_space<vmem>>, vector<2x32xf32>
    tpu.vector_store %arg10[%c6, %c0_30], %129 {strides = array<i32>} : memref<16x32xf32, #tpu.memory_space<vmem>>, vector<2x32xf32>,
    %131 = vector.extract_strided_slice %5 {offsets = [8, 0], sizes = [2, 96], strides = [1, 1]} : vector<16x96xf32> to vector<2x96xf32>
    %cst_31 = arith.constant dense<0.000000e+00> : vector<2x96xf32>
    %132 = tpu.matmul %129, %6, %cst_31 {dimension_numbers = #tpu.dot_dimension_numbers<[1], [0], [0], [1], [0, 0, 1, 1], [], []>} : vector<2x32xf32>, vector<32x96xf32>, vector<2x96xf32> -> vector<2x96xf32>
    %133 = vector.extract_strided_slice %131 {offsets = [0, 0], sizes = [2, 32], strides = [1, 1]} : vector<2x96xf32> to vector<2x32xf32>
    %134 = vector.extract_strided_slice %132 {offsets = [0, 0], sizes = [2, 32], strides = [1, 1]} : vector<2x96xf32> to vector<2x32xf32>
    %135 = arith.addf %133, %134 : vector<2x32xf32>
    %136 = arith.negf %135 : vector<2x32xf32>
    %137 = math.exp %136 : vector<2x32xf32>
    %cst_32 = arith.constant 1.000000e+00 : f32
    %138 = vector.broadcast %cst_32 : f32 to vector<2x32xf32>
    %139 = arith.addf %138, %137 : vector<2x32xf32>
    %140 = arith.divf %138, %139 : vector<2x32xf32>
    %141 = vector.extract_strided_slice %131 {offsets = [0, 32], sizes = [2, 32], strides = [1, 1]} : vector<2x96xf32> to vector<2x32xf32>
    %142 = vector.extract_strided_slice %132 {offsets = [0, 32], sizes = [2, 32], strides = [1, 1]} : vector<2x96xf32> to vector<2x32xf32>
    %143 = arith.addf %141, %142 : vector<2x32xf32>
    %144 = arith.negf %143 : vector<2x32xf32>
    %145 = math.exp %144 : vector<2x32xf32>
    %cst_33 = arith.constant 1.000000e+00 : f32
    %146 = vector.broadcast %cst_33 : f32 to vector<2x32xf32>
    %147 = arith.addf %146, %145 : vector<2x32xf32>
    %148 = arith.divf %146, %147 : vector<2x32xf32>
    %149 = vector.extract_strided_slice %131 {offsets = [0, 64], sizes = [2, 32], strides = [1, 1]} : vector<2x96xf32> to vector<2x32xf32>
    %150 = vector.extract_strided_slice %132 {offsets = [0, 64], sizes = [2, 32], strides = [1, 1]} : vector<2x96xf32> to vector<2x32xf32>
    %151 = arith.addf %150, %9 : vector<2x32xf32>
    %152 = arith.mulf %140, %151 : vector<2x32xf32>
    %153 = arith.addf %149, %152 : vector<2x32xf32>
    %154 = math.tanh %153 : vector<2x32xf32>
    %cst_34 = arith.constant 1.000000e+00 : f32
    %155 = vector.broadcast %cst_34 : f32 to vector<2x32xf32>
    %156 = arith.subf %155, %148 : vector<2x32xf32>
    %157 = arith.mulf %156, %154 : vector<2x32xf32>
    %158 = arith.mulf %148, %129 : vector<2x32xf32>
    %159 = arith.addf %157, %158 : vector<2x32xf32>
    %c8 = arith.constant 8 : index
    %c0_35 = arith.constant 0 : index
    %160 = vector.load %arg10[%c8, %c0_35] : memref<16x32xf32, #tpu.memory_space<vmem>>, vector<2x32xf32>
    tpu.vector_store %arg10[%c8, %c0_35], %159 {strides = array<i32>} : memref<16x32xf32, #tpu.memory_space<vmem>>, vector<2x32xf32>,
    %161 = vector.extract_strided_slice %5 {offsets = [10, 0], sizes = [2, 96], strides = [1, 1]} : vector<16x96xf32> to vector<2x96xf32>
    %cst_36 = arith.constant dense<0.000000e+00> : vector<2x96xf32>
    %162 = tpu.matmul %159, %6, %cst_36 {dimension_numbers = #tpu.dot_dimension_numbers<[1], [0], [0], [1], [0, 0, 1, 1], [], []>} : vector<2x32xf32>, vector<32x96xf32>, vector<2x96xf32> -> vector<2x96xf32>
    %163 = vector.extract_strided_slice %161 {offsets = [0, 0], sizes = [2, 32], strides = [1, 1]} : vector<2x96xf32> to vector<2x32xf32>
    %164 = vector.extract_strided_slice %162 {offsets = [0, 0], sizes = [2, 32], strides = [1, 1]} : vector<2x96xf32> to vector<2x32xf32>
    %165 = arith.addf %163, %164 : vector<2x32xf32>
    %166 = arith.negf %165 : vector<2x32xf32>
    %167 = math.exp %166 : vector<2x32xf32>
    %cst_37 = arith.constant 1.000000e+00 : f32
    %168 = vector.broadcast %cst_37 : f32 to vector<2x32xf32>
    %169 = arith.addf %168, %167 : vector<2x32xf32>
    %170 = arith.divf %168, %169 : vector<2x32xf32>
    %171 = vector.extract_strided_slice %161 {offsets = [0, 32], sizes = [2, 32], strides = [1, 1]} : vector<2x96xf32> to vector<2x32xf32>
    %172 = vector.extract_strided_slice %162 {offsets = [0, 32], sizes = [2, 32], strides = [1, 1]} : vector<2x96xf32> to vector<2x32xf32>
    %173 = arith.addf %171, %172 : vector<2x32xf32>
    %174 = arith.negf %173 : vector<2x32xf32>
    %175 = math.exp %174 : vector<2x32xf32>
    %cst_38 = arith.constant 1.000000e+00 : f32
    %176 = vector.broadcast %cst_38 : f32 to vector<2x32xf32>
    %177 = arith.addf %176, %175 : vector<2x32xf32>
    %178 = arith.divf %176, %177 : vector<2x32xf32>
    %179 = vector.extract_strided_slice %161 {offsets = [0, 64], sizes = [2, 32], strides = [1, 1]} : vector<2x96xf32> to vector<2x32xf32>
    %180 = vector.extract_strided_slice %162 {offsets = [0, 64], sizes = [2, 32], strides = [1, 1]} : vector<2x96xf32> to vector<2x32xf32>
    %181 = arith.addf %180, %9 : vector<2x32xf32>
    %182 = arith.mulf %170, %181 : vector<2x32xf32>
    %183 = arith.addf %179, %182 : vector<2x32xf32>
    %184 = math.tanh %183 : vector<2x32xf32>
    %cst_39 = arith.constant 1.000000e+00 : f32
    %185 = vector.broadcast %cst_39 : f32 to vector<2x32xf32>
    %186 = arith.subf %185, %178 : vector<2x32xf32>
    %187 = arith.mulf %186, %184 : vector<2x32xf32>
    %188 = arith.mulf %178, %159 : vector<2x32xf32>
    %189 = arith.addf %187, %188 : vector<2x32xf32>
    %c10 = arith.constant 10 : index
    %c0_40 = arith.constant 0 : index
    %190 = vector.load %arg10[%c10, %c0_40] : memref<16x32xf32, #tpu.memory_space<vmem>>, vector<2x32xf32>
    tpu.vector_store %arg10[%c10, %c0_40], %189 {strides = array<i32>} : memref<16x32xf32, #tpu.memory_space<vmem>>, vector<2x32xf32>,
    %191 = vector.extract_strided_slice %5 {offsets = [12, 0], sizes = [2, 96], strides = [1, 1]} : vector<16x96xf32> to vector<2x96xf32>
    %cst_41 = arith.constant dense<0.000000e+00> : vector<2x96xf32>
    %192 = tpu.matmul %189, %6, %cst_41 {dimension_numbers = #tpu.dot_dimension_numbers<[1], [0], [0], [1], [0, 0, 1, 1], [], []>} : vector<2x32xf32>, vector<32x96xf32>, vector<2x96xf32> -> vector<2x96xf32>
    %193 = vector.extract_strided_slice %191 {offsets = [0, 0], sizes = [2, 32], strides = [1, 1]} : vector<2x96xf32> to vector<2x32xf32>
    %194 = vector.extract_strided_slice %192 {offsets = [0, 0], sizes = [2, 32], strides = [1, 1]} : vector<2x96xf32> to vector<2x32xf32>
    %195 = arith.addf %193, %194 : vector<2x32xf32>
    %196 = arith.negf %195 : vector<2x32xf32>
    %197 = math.exp %196 : vector<2x32xf32>
    %cst_42 = arith.constant 1.000000e+00 : f32
    %198 = vector.broadcast %cst_42 : f32 to vector<2x32xf32>
    %199 = arith.addf %198, %197 : vector<2x32xf32>
    %200 = arith.divf %198, %199 : vector<2x32xf32>
    %201 = vector.extract_strided_slice %191 {offsets = [0, 32], sizes = [2, 32], strides = [1, 1]} : vector<2x96xf32> to vector<2x32xf32>
    %202 = vector.extract_strided_slice %192 {offsets = [0, 32], sizes = [2, 32], strides = [1, 1]} : vector<2x96xf32> to vector<2x32xf32>
    %203 = arith.addf %201, %202 : vector<2x32xf32>
    %204 = arith.negf %203 : vector<2x32xf32>
    %205 = math.exp %204 : vector<2x32xf32>
    %cst_43 = arith.constant 1.000000e+00 : f32
    %206 = vector.broadcast %cst_43 : f32 to vector<2x32xf32>
    %207 = arith.addf %206, %205 : vector<2x32xf32>
    %208 = arith.divf %206, %207 : vector<2x32xf32>
    %209 = vector.extract_strided_slice %191 {offsets = [0, 64], sizes = [2, 32], strides = [1, 1]} : vector<2x96xf32> to vector<2x32xf32>
    %210 = vector.extract_strided_slice %192 {offsets = [0, 64], sizes = [2, 32], strides = [1, 1]} : vector<2x96xf32> to vector<2x32xf32>
    %211 = arith.addf %210, %9 : vector<2x32xf32>
    %212 = arith.mulf %200, %211 : vector<2x32xf32>
    %213 = arith.addf %209, %212 : vector<2x32xf32>
    %214 = math.tanh %213 : vector<2x32xf32>
    %cst_44 = arith.constant 1.000000e+00 : f32
    %215 = vector.broadcast %cst_44 : f32 to vector<2x32xf32>
    %216 = arith.subf %215, %208 : vector<2x32xf32>
    %217 = arith.mulf %216, %214 : vector<2x32xf32>
    %218 = arith.mulf %208, %189 : vector<2x32xf32>
    %219 = arith.addf %217, %218 : vector<2x32xf32>
    %c12 = arith.constant 12 : index
    %c0_45 = arith.constant 0 : index
    %220 = vector.load %arg10[%c12, %c0_45] : memref<16x32xf32, #tpu.memory_space<vmem>>, vector<2x32xf32>
    tpu.vector_store %arg10[%c12, %c0_45], %219 {strides = array<i32>} : memref<16x32xf32, #tpu.memory_space<vmem>>, vector<2x32xf32>,
    %221 = vector.extract_strided_slice %5 {offsets = [14, 0], sizes = [2, 96], strides = [1, 1]} : vector<16x96xf32> to vector<2x96xf32>
    %cst_46 = arith.constant dense<0.000000e+00> : vector<2x96xf32>
    %222 = tpu.matmul %219, %6, %cst_46 {dimension_numbers = #tpu.dot_dimension_numbers<[1], [0], [0], [1], [0, 0, 1, 1], [], []>} : vector<2x32xf32>, vector<32x96xf32>, vector<2x96xf32> -> vector<2x96xf32>
    %223 = vector.extract_strided_slice %221 {offsets = [0, 0], sizes = [2, 32], strides = [1, 1]} : vector<2x96xf32> to vector<2x32xf32>
    %224 = vector.extract_strided_slice %222 {offsets = [0, 0], sizes = [2, 32], strides = [1, 1]} : vector<2x96xf32> to vector<2x32xf32>
    %225 = arith.addf %223, %224 : vector<2x32xf32>
    %226 = arith.negf %225 : vector<2x32xf32>
    %227 = math.exp %226 : vector<2x32xf32>
    %cst_47 = arith.constant 1.000000e+00 : f32
    %228 = vector.broadcast %cst_47 : f32 to vector<2x32xf32>
    %229 = arith.addf %228, %227 : vector<2x32xf32>
    %230 = arith.divf %228, %229 : vector<2x32xf32>
    %231 = vector.extract_strided_slice %221 {offsets = [0, 32], sizes = [2, 32], strides = [1, 1]} : vector<2x96xf32> to vector<2x32xf32>
    %232 = vector.extract_strided_slice %222 {offsets = [0, 32], sizes = [2, 32], strides = [1, 1]} : vector<2x96xf32> to vector<2x32xf32>
    %233 = arith.addf %231, %232 : vector<2x32xf32>
    %234 = arith.negf %233 : vector<2x32xf32>
    %235 = math.exp %234 : vector<2x32xf32>
    %cst_48 = arith.constant 1.000000e+00 : f32
    %236 = vector.broadcast %cst_48 : f32 to vector<2x32xf32>
    %237 = arith.addf %236, %235 : vector<2x32xf32>
    %238 = arith.divf %236, %237 : vector<2x32xf32>
    %239 = vector.extract_strided_slice %221 {offsets = [0, 64], sizes = [2, 32], strides = [1, 1]} : vector<2x96xf32> to vector<2x32xf32>
    %240 = vector.extract_strided_slice %222 {offsets = [0, 64], sizes = [2, 32], strides = [1, 1]} : vector<2x96xf32> to vector<2x32xf32>
    %241 = arith.addf %240, %9 : vector<2x32xf32>
    %242 = arith.mulf %230, %241 : vector<2x32xf32>
    %243 = arith.addf %239, %242 : vector<2x32xf32>
    %244 = math.tanh %243 : vector<2x32xf32>
    %cst_49 = arith.constant 1.000000e+00 : f32
    %245 = vector.broadcast %cst_49 : f32 to vector<2x32xf32>
    %246 = arith.subf %245, %238 : vector<2x32xf32>
    %247 = arith.mulf %246, %244 : vector<2x32xf32>
    %248 = arith.mulf %238, %219 : vector<2x32xf32>
    %249 = arith.addf %247, %248 : vector<2x32xf32>
    %c14 = arith.constant 14 : index
    %c0_50 = arith.constant 0 : index
    %250 = vector.load %arg10[%c14, %c0_50] : memref<16x32xf32, #tpu.memory_space<vmem>>, vector<2x32xf32>
    tpu.vector_store %arg10[%c14, %c0_50], %249 {strides = array<i32>} : memref<16x32xf32, #tpu.memory_space<vmem>>, vector<2x32xf32>,
    %c0_51 = arith.constant 0 : index
    %c0_52 = arith.constant 0 : index
    %251 = vector.load %arg10[%c0_51, %c0_52] : memref<16x32xf32, #tpu.memory_space<vmem>>, vector<16x32xf32>
    %c0_53 = arith.constant 0 : index
    %c0_54 = arith.constant 0 : index
    %252 = vector.load %arg5[%c0_53, %c0_54] : memref<32x64xf32, #tpu.memory_space<vmem>>, vector<32x64xf32>
    %cst_55 = arith.constant dense<0.000000e+00> : vector<16x64xf32>
    %253 = tpu.matmul %251, %252, %cst_55 {dimension_numbers = #tpu.dot_dimension_numbers<[1], [0], [0], [1], [0, 0, 1, 1], [], []>} : vector<16x32xf32>, vector<32x64xf32>, vector<16x64xf32> -> vector<16x64xf32>
    %c0_56 = arith.constant 0 : index
    %c0_57 = arith.constant 0 : index
    %254 = vector.load %arg6[%c0_56, %c0_57] : memref<1x64xf32, #tpu.memory_space<vmem>>, vector<1x64xf32>
    %255 = vector.broadcast %254 : vector<1x64xf32> to vector<16x64xf32>
    %256 = arith.addf %253, %255 : vector<16x64xf32>
    %cst_58 = arith.constant 0.000000e+00 : f32
    %257 = vector.broadcast %cst_58 : f32 to vector<16x64xf32>
    %258 = arith.maximumf %256, %257 : vector<16x64xf32>
    %c0_59 = arith.constant 0 : index
    %c0_60 = arith.constant 0 : index
    %259 = vector.load %arg7[%c0_59, %c0_60] : memref<64x128xf32, #tpu.memory_space<vmem>>, vector<64x128xf32>
    %cst_61 = arith.constant dense<0.000000e+00> : vector<16x128xf32>
    %260 = tpu.matmul %258, %259, %cst_61 {dimension_numbers = #tpu.dot_dimension_numbers<[1], [0], [0], [1], [0, 0, 1, 1], [], []>} : vector<16x64xf32>, vector<64x128xf32>, vector<16x128xf32> -> vector<16x128xf32>
    %c0_62 = arith.constant 0 : index
    %c0_63 = arith.constant 0 : index
    %261 = vector.load %arg8[%c0_62, %c0_63] : memref<1x128xf32, #tpu.memory_space<vmem>>, vector<1x128xf32>
    %262 = vector.broadcast %261 : vector<1x128xf32> to vector<16x128xf32>
    %263 = arith.addf %260, %262 : vector<16x128xf32>
    %c0_64 = arith.constant 0 : index
    %c0_65 = arith.constant 0 : index
    %264 = vector.load %arg9[%c0_64, %c0_65] : memref<16x128xf32, #tpu.memory_space<vmem>>, vector<16x128xf32>
    tpu.vector_store %arg9[%c0_64, %c0_65], %263 {strides = array<i32>} : memref<16x128xf32, #tpu.memory_space<vmem>>, vector<16x128xf32>,
    return
  }
}

</mosaic_0001>

<llo_original>
// kernel: grumlp_forward.1
$region0: #{grumlp_forward.1}
  #allocation0 [shape = 'u32[]', space=smem, size = 0x4, offset = 0x4, fixed_abs, tag = 'smem constant byte address 0x4 - core index']
  #allocation1 [shape = 'u32[144,128]{1,0:T(1,128)}', space=vmem, size = 0x12000, scoped, tag = 'internal scratch']
  #allocation2 [shape = 'f32[16,32]{1,0:T(8,128)}', space=vmem, size = 0x2000, scoped, tag = 'scratch operand']
  %s0 = inlined_call_operand.vmem [shape: f32[16,6], index: 0, kind: input, shape index: {}]
  %s1 = inlined_call_operand.vmem [shape: f32[6,96], index: 1, kind: input, shape index: {}]
  %s2 = inlined_call_operand.vmem [shape: f32[32,96], index: 2, kind: input, shape index: {}]
  %s3 = inlined_call_operand.vmem [shape: f32[1,96], index: 3, kind: input, shape index: {}]
  %s4 = inlined_call_operand.vmem [shape: f32[1,32], index: 4, kind: input, shape index: {}]
  %s5 = inlined_call_operand.vmem [shape: f32[32,64], index: 5, kind: input, shape index: {}]
  %s6 = inlined_call_operand.vmem [shape: f32[1,64], index: 6, kind: input, shape index: {}]
  %s7 = inlined_call_operand.vmem [shape: f32[64,128], index: 7, kind: input, shape index: {}]
  %s8 = inlined_call_operand.vmem [shape: f32[1,128], index: 8, kind: input, shape index: {}]
  %s9 = inlined_call_operand.vmem [shape: f32[16,128], index: 9, kind: output, shape index: {}]
  %s10 = sld [smem:[#allocation0]]
  $region46: #{grumlp_forward.1} parent=0
    _
  %s12 = ssub.s32 1, %s10
  %s13 = scalar_select 0, %s12, %s10
  // Predicated region
  $region2: #{grumlp_forward.1} parent=0 // pred_check
    _
  $region3: #{grumlp_forward.1} parent=0 // pred_check_branch
    %15 = sbr.rel (0) target = $region5
  $region4: #{grumlp_forward.1} parent=0 // pred_region
    _
  $region5: #{grumlp_forward.1} parent=0 // pred_fallthru
    _
  // Predicated region
  $region6: #{grumlp_forward.1} parent=0 // pred_check
    _
  $region7: #{grumlp_forward.1} parent=0 // pred_check_branch
    %17 = sbr.rel (0) target = $region9
  $region8: #{grumlp_forward.1} parent=0 // pred_region
    _
  $region9: #{grumlp_forward.1} parent=0 // pred_fallthru
    _
  // Predicated region
  $region10: #{grumlp_forward.1} parent=0 // pred_check
    _
  $region11: #{grumlp_forward.1} parent=0 // pred_check_branch
    %19 = sbr.rel (0) target = $region13
  $region12: #{grumlp_forward.1} parent=0 // pred_region
    _
  $region13: #{grumlp_forward.1} parent=0 // pred_fallthru
    _
  // Predicated region
  $region14: #{grumlp_forward.1} parent=0 // pred_check
    _
  $region15: #{grumlp_forward.1} parent=0 // pred_check_branch
    %21 = sbr.rel (0) target = $region17
  $region16: #{grumlp_forward.1} parent=0 // pred_region
    _
  $region17: #{grumlp_forward.1} parent=0 // pred_fallthru
    _
  // Predicated region
  $region18: #{grumlp_forward.1} parent=0 // pred_check
    _
  $region19: #{grumlp_forward.1} parent=0 // pred_check_branch
    %23 = sbr.rel (0) target = $region21
  $region20: #{grumlp_forward.1} parent=0 // pred_region
    _
  $region21: #{grumlp_forward.1} parent=0 // pred_fallthru
    _
  // Predicated region
  $region22: #{grumlp_forward.1} parent=0 // pred_check
    _
  $region23: #{grumlp_forward.1} parent=0 // pred_check_branch
    %25 = sbr.rel (0) target = $region25
  $region24: #{grumlp_forward.1} parent=0 // pred_region
    _
  $region25: #{grumlp_forward.1} parent=0 // pred_fallthru
    _
  // Predicated region
  $region26: #{grumlp_forward.1} parent=0 // pred_check
    _
  $region27: #{grumlp_forward.1} parent=0 // pred_check_branch
    %27 = sbr.rel (0) target = $region29
  $region28: #{grumlp_forward.1} parent=0 // pred_region
    _
  $region29: #{grumlp_forward.1} parent=0 // pred_fallthru
    _
  // Predicated region
  $region30: #{grumlp_forward.1} parent=0 // pred_check
    _
  $region31: #{grumlp_forward.1} parent=0 // pred_check_branch
    %29 = sbr.rel (0) target = $region33
  $region32: #{grumlp_forward.1} parent=0 // pred_region
    _
  $region33: #{grumlp_forward.1} parent=0 // pred_fallthru
    _
  // Predicated region
  $region34: #{grumlp_forward.1} parent=0 // pred_check
    _
  $region35: #{grumlp_forward.1} parent=0 // pred_check_branch
    %31 = sbr.rel (0) target = $region37
  $region36: #{grumlp_forward.1} parent=0 // pred_region
    _
  $region37: #{grumlp_forward.1} parent=0 // pred_fallthru
    _
  %v32 = vld [vmem:[%s0] sm:$0xff]
  %v33 = vld [vmem:[%s0 + $0x8] sm:$0xff]
  %v34 = vld [vmem:[%s1] sm:$0x3f]
  %v35 = vld [vmem:[%s3] sm:$0x1]
  %v37 = vlaneseq
  %v38 = vshrl.u32 %v37, 7
  %v39 = vsub.s32 0, %v38
  %v40 = vrot.slane %v35, %v39
  %vm42 = vcmask 48128
  %v44 = vsel %vm42, %v32, 0
  %v47 = vsel %vm42, %v33, 0
  %vm49 = vcmask 1045504
  %v51 = vsel %vm49, %v34, 0
  %53 = vmatprep.subr.mxu0 0.0
  %54 = vmatpush1.msra.mxu0 %v51
  %55 = vmatprep.subr.mxu0 0.0
  %56 = vmatpush1.msra.mxu0 0.0
  %57 = vmatprep.subr.mxu0 0.0
  %58 = vmatpush1.msra.mxu0 0.0
  %59 = vmatprep.subr.mxu0 0.0
  %60 = vmatpush1.msra.mxu0 0.0
  %61 = vmatprep.subr.mxu0 0.0
  %62 = vmatpush1.msra.mxu0 0.0
  %63 = vmatprep.subr.mxu0 0.0
  %64 = vmatpush1.msra.mxu0 0.0
  %65 = vmatprep.subr.mxu0 0.0
  %66 = vmatpush1.msra.mxu0 0.0
  %67 = vmatprep.subr.mxu0 0.0
  %68 = vmatpush1.msra.mxu0 0.0
  %69 = vmatprep.subr.mxu0 0.0
  %70 = vmatpush1.msra.mxu0 0.0
  %71 = vmatprep.subr.mxu0 0.0
  %72 = vmatpush1.msra.mxu0 0.0
  %73 = vmatprep.subr.mxu0 0.0
  %74 = vmatpush1.msra.mxu0 0.0
  %75 = vmatprep.subr.mxu0 0.0
  %76 = vmatpush1.msra.mxu0 0.0
  %77 = vmatprep.subr.mxu0 0.0
  %78 = vmatpush1.msra.mxu0 0.0
  %79 = vmatprep.subr.mxu0 0.0
  %80 = vmatpush1.msra.mxu0 0.0
  %81 = vmatprep.subr.mxu0 0.0
  %82 = vmatpush1.msra.mxu0 0.0
  %83 = vmatprep.subr.mxu0 0.0
  %84 = vmatpush1.msra.mxu0 0.0
  %85 = vmatprep.subr.mxu0 0.0
  %86 = vmatpush1.msra.mxu0 0.0
  %87 = vmatprep.subr.mxu0 0.0
  %88 = vmatpush1.msra.mxu0 0.0
  %89 = vmatprep.subr.mxu0 0.0
  %90 = vmatpush1.msra.mxu0 0.0
  %91 = vmatprep.subr.mxu0 0.0
  %92 = vmatpush1.msra.mxu0 0.0
  %93 = vmatprep.subr.mxu0 0.0
  %94 = vmatpush1.msra.mxu0 0.0
  %95 = vmatprep.subr.mxu0 0.0
  %96 = vmatpush1.msra.mxu0 0.0
  %97 = vmatprep.subr.mxu0 0.0
  %98 = vmatpush1.msra.mxu0 0.0
  %99 = vmatprep.subr.mxu0 0.0
  %100 = vmatpush1.msra.mxu0 0.0
  %101 = vmatprep.subr.mxu0 0.0
  %102 = vmatpush1.msra.mxu0 0.0
  %103 = vmatprep.subr.mxu0 0.0
  %104 = vmatpush1.msra.mxu0 0.0
  %105 = vmatprep.subr.mxu0 0.0
  %106 = vmatpush1.msra.mxu0 0.0
  %107 = vmatprep.subr.mxu0 0.0
  %108 = vmatpush1.msra.mxu0 0.0
  %109 = vmatprep.subr.mxu0 0.0
  %110 = vmatpush1.msra.mxu0 0.0
  %111 = vmatprep.subr.mxu0 0.0
  %112 = vmatpush1.msra.mxu0 0.0
  %113 = vmatprep.subr.mxu0 0.0
  %114 = vmatpush1.msra.mxu0 0.0
  %115 = vmatprep.subr.mxu0 0.0
  %116 = vmatpush1.msra.mxu0 0.0
  %117 = vmatprep.mubr.f32.mxu0 0.0
  %118 = vmatmul.mubr.f32.gmra.mrb[0].mxu0 %v44
  %v119 = vpop.f32.mrb[0].mxu0
  %v120 = vadd.f32 %v40, %v119
  %v121 = vpop.f32.mrb[0].mxu0
  %122 = vmatprep.mubr.f32.mxu0 0.0
  %123 = vmatmul.mubr.f32.gmra.mrb[0].mxu0 %v47
  %v124 = vpop.f32.mrb[0].mxu0
  %v125 = vadd.f32 %v40, %v124
  %v126 = vpop.f32.mrb[0].mxu0
  %127 = vdwg.mxu0
  %v128 = vld [vmem:[%s2] sm:$0xff]
  %v129 = vld [vmem:[%s2 + $0x8] sm:$0xff]
  %v130 = vld [vmem:[%s2 + $0x10] sm:$0xff]
  %v131 = vld [vmem:[%s2 + $0x18] sm:$0xff]
  %v132 = vld [vmem:[%s4] sm:$0x1]
  %v134 = vlaneseq
  %v135 = vshrl.u32 %v134, 7
  %v136 = vsub.s32 0, %v135
  %v137 = vrot.slane %v132, %v136
  %vm138 = vcmask 261120
  %v140 = vsel %vm138, 0.0, 0
  %142 = vmatprep.subr.mxu0 0.0
  %143 = vmatpush1.msra.mxu0 %v128
  %144 = vmatprep.subr.mxu0 0.0
  %145 = vmatpush1.msra.mxu0 %v129
  %146 = vmatprep.subr.mxu0 0.0
  %147 = vmatpush1.msra.mxu0 %v130
  %148 = vmatprep.subr.mxu0 0.0
  %149 = vmatpush1.msra.mxu0 %v131
  %150 = vmatprep.subr.mxu0 0.0
  %151 = vmatpush1.msra.mxu0 0.0
  %152 = vmatprep.subr.mxu0 0.0
  %153 = vmatpush1.msra.mxu0 0.0
  %154 = vmatprep.subr.mxu0 0.0
  %155 = vmatpush1.msra.mxu0 0.0
  %156 = vmatprep.subr.mxu0 0.0
  %157 = vmatpush1.msra.mxu0 0.0
  %158 = vmatprep.subr.mxu0 0.0
  %159 = vmatpush1.msra.mxu0 0.0
  %160 = vmatprep.subr.mxu0 0.0
  %161 = vmatpush1.msra.mxu0 0.0
  %162 = vmatprep.subr.mxu0 0.0
  %163 = vmatpush1.msra.mxu0 0.0
  %164 = vmatprep.subr.mxu0 0.0
  %165 = vmatpush1.msra.mxu0 0.0
  %166 = vmatprep.subr.mxu0 0.0
  %167 = vmatpush1.msra.mxu0 0.0
  %168 = vmatprep.subr.mxu0 0.0
  %169 = vmatpush1.msra.mxu0 0.0
  %170 = vmatprep.subr.mxu0 0.0
  %171 = vmatpush1.msra.mxu0 0.0
  %172 = vmatprep.subr.mxu0 0.0
  %173 = vmatpush1.msra.mxu0 0.0
  %174 = vmatprep.subr.mxu0 0.0
  %175 = vmatpush1.msra.mxu0 0.0
  %176 = vmatprep.subr.mxu0 0.0
  %177 = vmatpush1.msra.mxu0 0.0
  %178 = vmatprep.subr.mxu0 0.0
  %179 = vmatpush1.msra.mxu0 0.0
  %180 = vmatprep.subr.mxu0 0.0
  %181 = vmatpush1.msra.mxu0 0.0
  %182 = vmatprep.subr.mxu0 0.0
  %183 = vmatpush1.msra.mxu0 0.0
  %184 = vmatprep.subr.mxu0 0.0
  %185 = vmatpush1.msra.mxu0 0.0
  %186 = vmatprep.subr.mxu0 0.0
  %187 = vmatpush1.msra.mxu0 0.0
  %188 = vmatprep.subr.mxu0 0.0
  %189 = vmatpush1.msra.mxu0 0.0
  %190 = vmatprep.subr.mxu0 0.0
  %191 = vmatpush1.msra.mxu0 0.0
  %192 = vmatprep.subr.mxu0 0.0
  %193 = vmatpush1.msra.mxu0 0.0
  %194 = vmatprep.subr.mxu0 0.0
  %195 = vmatpush1.msra.mxu0 0.0
  %196 = vmatprep.subr.mxu0 0.0
  %197 = vmatpush1.msra.mxu0 0.0
  %198 = vmatprep.subr.mxu0 0.0
  %199 = vmatpush1.msra.mxu0 0.0
  %200 = vmatprep.subr.mxu0 0.0
  %201 = vmatpush1.msra.mxu0 0.0
  %202 = vmatprep.subr.mxu0 0.0
  %203 = vmatpush1.msra.mxu0 0.0
  %204 = vmatprep.subr.mxu0 0.0
  %205 = vmatpush1.msra.mxu0 0.0
  %206 = vmatprep.mubr.f32.mxu0 0.0
  %207 = vmatmul.mubr.f32.gmra.mrb[0].mxu0 %v140
  %v208 = vpop.f32.mrb[0].mxu0
  %v209 = vadd.f32 0.0, %v208
  %v210 = vpop.f32.mrb[0].mxu0
  %211 = vdwg.mxu0
  %v212 = vadd.f32 %v120, %v209
  %v213 = vxor.u32 %v212, 2147483648
  %v214 = vmul.f32 %v213, 1.442695
  %v215 = vpow.pop %v214
  %v216 = vadd.f32 %v215, 1.0
  %v217 = vrcp.pop %v216
  %v218 = vmul.f32 1.0, %v217
  %219 = vrot.lane.b32.xlu0 %v137, 64
  %v220 = vpop.permute.xlu0 %219
  %v222 = vadd.f32 %v209, %v220
  %224 = vrot.lane.b32.xlu0 %v222, 64
  %v225 = vpop.permute.xlu0 %224
  %v227 = vmul.f32 %v218, %v225
  %229 = vrot.lane.b32.xlu0 %v227, 64
  %v230 = vpop.permute.xlu0 %229
  %v232 = vadd.f32 %v120, %v230
  %v233 = vtanh.pop %v232
  %v234 = vsub.f32 1.0, %v218
  %236 = vrot.lane.b32.xlu0 %v233, 96
  %v237 = vpop.permute.xlu0 %236
  %v239 = vmul.f32 %v234, %v237
  %v240 = vmul.f32 %v218, 0.0
  %v241 = vadd.f32 %v239, %v240
  %243 = vrot.lane.b32.xlu0 %v241, 96
  %v244 = vpop.permute.xlu0 %243
  %vm246 = vcmask 254976
  %247 = vst.msk [vmem:[#allocation2] sm:$0x3] %vm246, %v244
  %v248 = vsel %vm138, %v244, 0
  %250 = vmatprep.subr.mxu0 0.0
  %251 = vmatpush1.msra.mxu0 %v128
  %252 = vmatprep.subr.mxu0 0.0
  %253 = vmatpush1.msra.mxu0 %v129
  %254 = vmatprep.subr.mxu0 0.0
  %255 = vmatpush1.msra.mxu0 %v130
  %256 = vmatprep.subr.mxu0 0.0
  %257 = vmatpush1.msra.mxu0 %v131
  %258 = vmatprep.subr.mxu0 0.0
  %259 = vmatpush1.msra.mxu0 0.0
  %260 = vmatprep.subr.mxu0 0.0
  %261 = vmatpush1.msra.mxu0 0.0
  %262 = vmatprep.subr.mxu0 0.0
  %263 = vmatpush1.msra.mxu0 0.0
  %264 = vmatprep.subr.mxu0 0.0
  %265 = vmatpush1.msra.mxu0 0.0
  %266 = vmatprep.subr.mxu0 0.0
  %267 = vmatpush1.msra.mxu0 0.0
  %268 = vmatprep.subr.mxu0 0.0
  %269 = vmatpush1.msra.mxu0 0.0
  %270 = vmatprep.subr.mxu0 0.0
  %271 = vmatpush1.msra.mxu0 0.0
  %272 = vmatprep.subr.mxu0 0.0
  %273 = vmatpush1.msra.mxu0 0.0
  %274 = vmatprep.subr.mxu0 0.0
  %275 = vmatpush1.msra.mxu0 0.0
  %276 = vmatprep.subr.mxu0 0.0
  %277 = vmatpush1.msra.mxu0 0.0
  %278 = vmatprep.subr.mxu0 0.0
  %279 = vmatpush1.msra.mxu0 0.0
  %280 = vmatprep.subr.mxu0 0.0
  %281 = vmatpush1.msra.mxu0 0.0
  %282 = vmatprep.subr.mxu0 0.0
  %283 = vmatpush1.msra.mxu0 0.0
  %284 = vmatprep.subr.mxu0 0.0
  %285 = vmatpush1.msra.mxu0 0.0
  %286 = vmatprep.subr.mxu0 0.0
  %287 = vmatpush1.msra.mxu0 0.0
  %288 = vmatprep.subr.mxu0 0.0
  %289 = vmatpush1.msra.mxu0 0.0
  %290 = vmatprep.subr.mxu0 0.0
  %291 = vmatpush1.msra.mxu0 0.0
  %292 = vmatprep.subr.mxu0 0.0
  %293 = vmatpush1.msra.mxu0 0.0
  %294 = vmatprep.subr.mxu0 0.0
  %295 = vmatpush1.msra.mxu0 0.0
  %296 = vmatprep.subr.mxu0 0.0
  %297 = vmatpush1.msra.mxu0 0.0
  %298 = vmatprep.subr.mxu0 0.0
  %299 = vmatpush1.msra.mxu0 0.0
  %300 = vmatprep.subr.mxu0 0.0
  %301 = vmatpush1.msra.mxu0 0.0
  %302 = vmatprep.subr.mxu0 0.0
  %303 = vmatpush1.msra.mxu0 0.0
  %304 = vmatprep.subr.mxu0 0.0
  %305 = vmatpush1.msra.mxu0 0.0
  %306 = vmatprep.subr.mxu0 0.0
  %307 = vmatpush1.msra.mxu0 0.0
  %308 = vmatprep.subr.mxu0 0.0
  %309 = vmatpush1.msra.mxu0 0.0
  %310 = vmatprep.subr.mxu0 0.0
  %311 = vmatpush1.msra.mxu0 0.0
  %312 = vmatprep.subr.mxu0 0.0
  %313 = vmatpush1.msra.mxu0 0.0
  %314 = vmatprep.mubr.f32.mxu0 0.0
  %315 = vmatmul.mubr.f32.gmra.mrb[0].mxu0 %v248
  %v316 = vpop.f32.mrb[0].mxu0
  %v317 = vadd.f32 0.0, %v316
  %v318 = vpop.f32.mrb[0].mxu0
  %319 = vdwg.mxu0
  %v321 = vrot.slane %v317, 6
  %v323 = vadd.f32 %v120, %v321
  %v324 = vxor.u32 %v323, 2147483648
  %v325 = vmul.f32 %v324, 1.442695
  %v326 = vpow.pop %v325
  %v327 = vadd.f32 %v326, 1.0
  %v328 = vrcp.pop %v327
  %v329 = vmul.f32 1.0, %v328
  %v330 = vadd.f32 %v317, %v220
  %v332 = vrot.slane %v330, 6
  %333 = vrot.lane.b32.xlu0 %v332, 64
  %v334 = vpop.permute.xlu0 %333
  %v336 = vmul.f32 %v329, %v334
  %338 = vrot.lane.b32.xlu0 %v336, 64
  %v339 = vpop.permute.xlu0 %338
  %v341 = vadd.f32 %v120, %v339
  %v342 = vtanh.pop %v341
  %v343 = vsub.f32 1.0, %v329
  %345 = vrot.lane.b32.xlu0 %v342, 96
  %v346 = vpop.permute.xlu0 %345
  %v348 = vmul.f32 %v343, %v346
  %v349 = vrot.slane %v241, 6
  %v351 = vmul.f32 %v329, %v349
  %v352 = vadd.f32 %v348, %v351
  %354 = vrot.lane.b32.xlu0 %v352, 96
  %v355 = vpop.permute.xlu0 %354
  %vm357 = vcmask 257026
  %358 = vst.msk [vmem:[#allocation2] sm:$0xc] %vm357, %v355
  %v359 = vrot.slane %v352, 2
  %360 = vrot.lane.b32.xlu0 %v359, 96
  %v361 = vpop.permute.xlu0 %360
  %v362 = vsel %vm138, %v361, 0
  %364 = vmatprep.subr.mxu0 0.0
  %365 = vmatpush1.msra.mxu0 %v128
  %366 = vmatprep.subr.mxu0 0.0
  %367 = vmatpush1.msra.mxu0 %v129
  %368 = vmatprep.subr.mxu0 0.0
  %369 = vmatpush1.msra.mxu0 %v130
  %370 = vmatprep.subr.mxu0 0.0
  %371 = vmatpush1.msra.mxu0 %v131
  %372 = vmatprep.subr.mxu0 0.0
  %373 = vmatpush1.msra.mxu0 0.0
  %374 = vmatprep.subr.mxu0 0.0
  %375 = vmatpush1.msra.mxu0 0.0
  %376 = vmatprep.subr.mxu0 0.0
  %377 = vmatpush1.msra.mxu0 0.0
  %378 = vmatprep.subr.mxu0 0.0
  %379 = vmatpush1.msra.mxu0 0.0
  %380 = vmatprep.subr.mxu0 0.0
  %381 = vmatpush1.msra.mxu0 0.0
  %382 = vmatprep.subr.mxu0 0.0
  %383 = vmatpush1.msra.mxu0 0.0
  %384 = vmatprep.subr.mxu0 0.0
  %385 = vmatpush1.msra.mxu0 0.0
  %386 = vmatprep.subr.mxu0 0.0
  %387 = vmatpush1.msra.mxu0 0.0
  %388 = vmatprep.subr.mxu0 0.0
  %389 = vmatpush1.msra.mxu0 0.0
  %390 = vmatprep.subr.mxu0 0.0
  %391 = vmatpush1.msra.mxu0 0.0
  %392 = vmatprep.subr.mxu0 0.0
  %393 = vmatpush1.msra.mxu0 0.0
  %394 = vmatprep.subr.mxu0 0.0
  %395 = vmatpush1.msra.mxu0 0.0
  %396 = vmatprep.subr.mxu0 0.0
  %397 = vmatpush1.msra.mxu0 0.0
  %398 = vmatprep.subr.mxu0 0.0
  %399 = vmatpush1.msra.mxu0 0.0
  %400 = vmatprep.subr.mxu0 0.0
  %401 = vmatpush1.msra.mxu0 0.0
  %402 = vmatprep.subr.mxu0 0.0
  %403 = vmatpush1.msra.mxu0 0.0
  %404 = vmatprep.subr.mxu0 0.0
  %405 = vmatpush1.msra.mxu0 0.0
  %406 = vmatprep.subr.mxu0 0.0
  %407 = vmatpush1.msra.mxu0 0.0
  %408 = vmatprep.subr.mxu0 0.0
  %409 = vmatpush1.msra.mxu0 0.0
  %410 = vmatprep.subr.mxu0 0.0
  %411 = vmatpush1.msra.mxu0 0.0
  %412 = vmatprep.subr.mxu0 0.0
  %413 = vmatpush1.msra.mxu0 0.0
  %414 = vmatprep.subr.mxu0 0.0
  %415 = vmatpush1.msra.mxu0 0.0
  %416 = vmatprep.subr.mxu0 0.0
  %417 = vmatpush1.msra.mxu0 0.0
  %418 = vmatprep.subr.mxu0 0.0
  %419 = vmatpush1.msra.mxu0 0.0
  %420 = vmatprep.subr.mxu0 0.0
  %421 = vmatpush1.msra.mxu0 0.0
  %422 = vmatprep.subr.mxu0 0.0
  %423 = vmatpush1.msra.mxu0 0.0
  %424 = vmatprep.subr.mxu0 0.0
  %425 = vmatpush1.msra.mxu0 0.0
  %426 = vmatprep.subr.mxu0 0.0
  %427 = vmatpush1.msra.mxu0 0.0
  %428 = vmatprep.mubr.f32.mxu0 0.0
  %429 = vmatmul.mubr.f32.gmra.mrb[0].mxu0 %v362
  %v430 = vpop.f32.mrb[0].mxu0
  %v431 = vadd.f32 0.0, %v430
  %v432 = vpop.f32.mrb[0].mxu0
  %433 = vdwg.mxu0
  %v435 = vrot.slane %v431, 4
  %v437 = vadd.f32 %v120, %v435
  %v438 = vxor.u32 %v437, 2147483648
  %v439 = vmul.f32 %v438, 1.442695
  %v440 = vpow.pop %v439
  %v441 = vadd.f32 %v440, 1.0
  %v442 = vrcp.pop %v441
  %v443 = vmul.f32 1.0, %v442
  %v444 = vadd.f32 %v431, %v220
  %v446 = vrot.slane %v444, 4
  %447 = vrot.lane.b32.xlu0 %v446, 64
  %v448 = vpop.permute.xlu0 %447
  %v450 = vmul.f32 %v443, %v448
  %452 = vrot.lane.b32.xlu0 %v450, 64
  %v453 = vpop.permute.xlu0 %452
  %v455 = vadd.f32 %v120, %v453
  %v456 = vtanh.pop %v455
  %v457 = vsub.f32 1.0, %v443
  %459 = vrot.lane.b32.xlu0 %v456, 96
  %v460 = vpop.permute.xlu0 %459
  %v462 = vmul.f32 %v457, %v460
  %v463 = vrot.slane %v352, 6
  %v465 = vmul.f32 %v443, %v463
  %v466 = vadd.f32 %v462, %v465
  %468 = vrot.lane.b32.xlu0 %v466, 96
  %v469 = vpop.permute.xlu0 %468
  %vm471 = vcmask 259076
  %472 = vst.msk [vmem:[#allocation2] sm:$0x30] %vm471, %v469
  %v473 = vrot.slane %v466, 4
  %474 = vrot.lane.b32.xlu0 %v473, 96
  %v475 = vpop.permute.xlu0 %474
  %v476 = vsel %vm138, %v475, 0
  %478 = vmatprep.subr.mxu0 0.0
  %479 = vmatpush1.msra.mxu0 %v128
  %480 = vmatprep.subr.mxu0 0.0
  %481 = vmatpush1.msra.mxu0 %v129
  %482 = vmatprep.subr.mxu0 0.0
  %483 = vmatpush1.msra.mxu0 %v130
  %484 = vmatprep.subr.mxu0 0.0
  %485 = vmatpush1.msra.mxu0 %v131
  %486 = vmatprep.subr.mxu0 0.0
  %487 = vmatpush1.msra.mxu0 0.0
  %488 = vmatprep.subr.mxu0 0.0
  %489 = vmatpush1.msra.mxu0 0.0
  %490 = vmatprep.subr.mxu0 0.0
  %491 = vmatpush1.msra.mxu0 0.0
  %492 = vmatprep.subr.mxu0 0.0
  %493 = vmatpush1.msra.mxu0 0.0
  %494 = vmatprep.subr.mxu0 0.0
  %495 = vmatpush1.msra.mxu0 0.0
  %496 = vmatprep.subr.mxu0 0.0
  %497 = vmatpush1.msra.mxu0 0.0
  %498 = vmatprep.subr.mxu0 0.0
  %499 = vmatpush1.msra.mxu0 0.0
  %500 = vmatprep.subr.mxu0 0.0
  %501 = vmatpush1.msra.mxu0 0.0
  %502 = vmatprep.subr.mxu0 0.0
  %503 = vmatpush1.msra.mxu0 0.0
  %504 = vmatprep.subr.mxu0 0.0
  %505 = vmatpush1.msra.mxu0 0.0
  %506 = vmatprep.subr.mxu0 0.0
  %507 = vmatpush1.msra.mxu0 0.0
  %508 = vmatprep.subr.mxu0 0.0
  %509 = vmatpush1.msra.mxu0 0.0
  %510 = vmatprep.subr.mxu0 0.0
  %511 = vmatpush1.msra.mxu0 0.0
  %512 = vmatprep.subr.mxu0 0.0
  %513 = vmatpush1.msra.mxu0 0.0
  %514 = vmatprep.subr.mxu0 0.0
  %515 = vmatpush1.msra.mxu0 0.0
  %516 = vmatprep.subr.mxu0 0.0
  %517 = vmatpush1.msra.mxu0 0.0
  %518 = vmatprep.subr.mxu0 0.0
  %519 = vmatpush1.msra.mxu0 0.0
  %520 = vmatprep.subr.mxu0 0.0
  %521 = vmatpush1.msra.mxu0 0.0
  %522 = vmatprep.subr.mxu0 0.0
  %523 = vmatpush1.msra.mxu0 0.0
  %524 = vmatprep.subr.mxu0 0.0
  %525 = vmatpush1.msra.mxu0 0.0
  %526 = vmatprep.subr.mxu0 0.0
  %527 = vmatpush1.msra.mxu0 0.0
  %528 = vmatprep.subr.mxu0 0.0
  %529 = vmatpush1.msra.mxu0 0.0
  %530 = vmatprep.subr.mxu0 0.0
  %531 = vmatpush1.msra.mxu0 0.0
  %532 = vmatprep.subr.mxu0 0.0
  %533 = vmatpush1.msra.mxu0 0.0
  %534 = vmatprep.subr.mxu0 0.0
  %535 = vmatpush1.msra.mxu0 0.0
  %536 = vmatprep.subr.mxu0 0.0
  %537 = vmatpush1.msra.mxu0 0.0
  %538 = vmatprep.subr.mxu0 0.0
  %539 = vmatpush1.msra.mxu0 0.0
  %540 = vmatprep.subr.mxu0 0.0
  %541 = vmatpush1.msra.mxu0 0.0
  %542 = vmatprep.mubr.f32.mxu0 0.0
  %543 = vmatmul.mubr.f32.gmra.mrb[0].mxu0 %v476
  %v544 = vpop.f32.mrb[0].mxu0
  %v545 = vadd.f32 0.0, %v544
  %v546 = vpop.f32.mrb[0].mxu0
  %547 = vdwg.mxu0
  %v549 = vrot.slane %v545, 2
  %v551 = vadd.f32 %v120, %v549
  %v552 = vxor.u32 %v551, 2147483648
  %v553 = vmul.f32 %v552, 1.442695
  %v554 = vpow.pop %v553
  %v555 = vadd.f32 %v554, 1.0
  %v556 = vrcp.pop %v555
  %v557 = vmul.f32 1.0, %v556
  %v558 = vadd.f32 %v545, %v220
  %v560 = vrot.slane %v558, 2
  %561 = vrot.lane.b32.xlu0 %v560, 64
  %v562 = vpop.permute.xlu0 %561
  %v564 = vmul.f32 %v557, %v562
  %566 = vrot.lane.b32.xlu0 %v564, 64
  %v567 = vpop.permute.xlu0 %566
  %v569 = vadd.f32 %v120, %v567
  %v570 = vtanh.pop %v569
  %v571 = vsub.f32 1.0, %v557
  %573 = vrot.lane.b32.xlu0 %v570, 96
  %v574 = vpop.permute.xlu0 %573
  %v576 = vmul.f32 %v571, %v574
  %v577 = vrot.slane %v466, 6
  %v579 = vmul.f32 %v557, %v577
  %v580 = vadd.f32 %v576, %v579
  %582 = vrot.lane.b32.xlu0 %v580, 96
  %v583 = vpop.permute.xlu0 %582
  %vm585 = vcmask 261126
  %586 = vst.msk [vmem:[#allocation2] sm:$0xc0] %vm585, %v583
  %v587 = vrot.slane %v580, 6
  %588 = vrot.lane.b32.xlu0 %v587, 96
  %v589 = vpop.permute.xlu0 %588
  %v590 = vsel %vm138, %v589, 0
  %592 = vmatprep.subr.mxu0 0.0
  %593 = vmatpush1.msra.mxu0 %v128
  %594 = vmatprep.subr.mxu0 0.0
  %595 = vmatpush1.msra.mxu0 %v129
  %596 = vmatprep.subr.mxu0 0.0
  %597 = vmatpush1.msra.mxu0 %v130
  %598 = vmatprep.subr.mxu0 0.0
  %599 = vmatpush1.msra.mxu0 %v131
  %600 = vmatprep.subr.mxu0 0.0
  %601 = vmatpush1.msra.mxu0 0.0
  %602 = vmatprep.subr.mxu0 0.0
  %603 = vmatpush1.msra.mxu0 0.0
  %604 = vmatprep.subr.mxu0 0.0
  %605 = vmatpush1.msra.mxu0 0.0
  %606 = vmatprep.subr.mxu0 0.0
  %607 = vmatpush1.msra.mxu0 0.0
  %608 = vmatprep.subr.mxu0 0.0
  %609 = vmatpush1.msra.mxu0 0.0
  %610 = vmatprep.subr.mxu0 0.0
  %611 = vmatpush1.msra.mxu0 0.0
  %612 = vmatprep.subr.mxu0 0.0
  %613 = vmatpush1.msra.mxu0 0.0
  %614 = vmatprep.subr.mxu0 0.0
  %615 = vmatpush1.msra.mxu0 0.0
  %616 = vmatprep.subr.mxu0 0.0
  %617 = vmatpush1.msra.mxu0 0.0
  %618 = vmatprep.subr.mxu0 0.0
  %619 = vmatpush1.msra.mxu0 0.0
  %620 = vmatprep.subr.mxu0 0.0
  %621 = vmatpush1.msra.mxu0 0.0
  %622 = vmatprep.subr.mxu0 0.0
  %623 = vmatpush1.msra.mxu0 0.0
  %624 = vmatprep.subr.mxu0 0.0
  %625 = vmatpush1.msra.mxu0 0.0
  %626 = vmatprep.subr.mxu0 0.0
  %627 = vmatpush1.msra.mxu0 0.0
  %628 = vmatprep.subr.mxu0 0.0
  %629 = vmatpush1.msra.mxu0 0.0
  %630 = vmatprep.subr.mxu0 0.0
  %631 = vmatpush1.msra.mxu0 0.0
  %632 = vmatprep.subr.mxu0 0.0
  %633 = vmatpush1.msra.mxu0 0.0
  %634 = vmatprep.subr.mxu0 0.0
  %635 = vmatpush1.msra.mxu0 0.0
  %636 = vmatprep.subr.mxu0 0.0
  %637 = vmatpush1.msra.mxu0 0.0
  %638 = vmatprep.subr.mxu0 0.0
  %639 = vmatpush1.msra.mxu0 0.0
  %640 = vmatprep.subr.mxu0 0.0
  %641 = vmatpush1.msra.mxu0 0.0
  %642 = vmatprep.subr.mxu0 0.0
  %643 = vmatpush1.msra.mxu0 0.0
  %644 = vmatprep.subr.mxu0 0.0
  %645 = vmatpush1.msra.mxu0 0.0
  %646 = vmatprep.subr.mxu0 0.0
  %647 = vmatpush1.msra.mxu0 0.0
  %648 = vmatprep.subr.mxu0 0.0
  %649 = vmatpush1.msra.mxu0 0.0
  %650 = vmatprep.subr.mxu0 0.0
  %651 = vmatpush1.msra.mxu0 0.0
  %652 = vmatprep.subr.mxu0 0.0
  %653 = vmatpush1.msra.mxu0 0.0
  %654 = vmatprep.subr.mxu0 0.0
  %655 = vmatpush1.msra.mxu0 0.0
  %656 = vmatprep.mubr.f32.mxu0 0.0
  %657 = vmatmul.mubr.f32.gmra.mrb[0].mxu0 %v590
  %v658 = vpop.f32.mrb[0].mxu0
  %v659 = vadd.f32 0.0, %v658
  %v660 = vpop.f32.mrb[0].mxu0
  %661 = vdwg.mxu0
  %v662 = vadd.f32 %v125, %v659
  %v663 = vxor.u32 %v662, 2147483648
  %v664 = vmul.f32 %v663, 1.442695
  %v665 = vpow.pop %v664
  %v666 = vadd.f32 %v665, 1.0
  %v667 = vrcp.pop %v666
  %v668 = vmul.f32 1.0, %v667
  %v669 = vadd.f32 %v659, %v220
  %671 = vrot.lane.b32.xlu0 %v669, 64
  %v672 = vpop.permute.xlu0 %671
  %v674 = vmul.f32 %v668, %v672
  %676 = vrot.lane.b32.xlu0 %v674, 64
  %v677 = vpop.permute.xlu0 %676
  %v679 = vadd.f32 %v125, %v677
  %v680 = vtanh.pop %v679
  %v681 = vsub.f32 1.0, %v668
  %683 = vrot.lane.b32.xlu0 %v680, 96
  %v684 = vpop.permute.xlu0 %683
  %v686 = vmul.f32 %v681, %v684
  %v688 = vmul.f32 %v668, %v587
  %v689 = vadd.f32 %v686, %v688
  %691 = vrot.lane.b32.xlu0 %v689, 96
  %v692 = vpop.permute.xlu0 %691
  %694 = vst.msk [vmem:[#allocation2 + $0x8] sm:$0x3] %vm246, %v692
  %v695 = vsel %vm138, %v692, 0
  %697 = vmatprep.subr.mxu0 0.0
  %698 = vmatpush1.msra.mxu0 %v128
  %699 = vmatprep.subr.mxu0 0.0
  %700 = vmatpush1.msra.mxu0 %v129
  %701 = vmatprep.subr.mxu0 0.0
  %702 = vmatpush1.msra.mxu0 %v130
  %703 = vmatprep.subr.mxu0 0.0
  %704 = vmatpush1.msra.mxu0 %v131
  %705 = vmatprep.subr.mxu0 0.0
  %706 = vmatpush1.msra.mxu0 0.0
  %707 = vmatprep.subr.mxu0 0.0
  %708 = vmatpush1.msra.mxu0 0.0
  %709 = vmatprep.subr.mxu0 0.0
  %710 = vmatpush1.msra.mxu0 0.0
  %711 = vmatprep.subr.mxu0 0.0
  %712 = vmatpush1.msra.mxu0 0.0
  %713 = vmatprep.subr.mxu0 0.0
  %714 = vmatpush1.msra.mxu0 0.0
  %715 = vmatprep.subr.mxu0 0.0
  %716 = vmatpush1.msra.mxu0 0.0
  %717 = vmatprep.subr.mxu0 0.0
  %718 = vmatpush1.msra.mxu0 0.0
  %719 = vmatprep.subr.mxu0 0.0
  %720 = vmatpush1.msra.mxu0 0.0
  %721 = vmatprep.subr.mxu0 0.0
  %722 = vmatpush1.msra.mxu0 0.0
  %723 = vmatprep.subr.mxu0 0.0
  %724 = vmatpush1.msra.mxu0 0.0
  %725 = vmatprep.subr.mxu0 0.0
  %726 = vmatpush1.msra.mxu0 0.0
  %727 = vmatprep.subr.mxu0 0.0
  %728 = vmatpush1.msra.mxu0 0.0
  %729 = vmatprep.subr.mxu0 0.0
  %730 = vmatpush1.msra.mxu0 0.0
  %731 = vmatprep.subr.mxu0 0.0
  %732 = vmatpush1.msra.mxu0 0.0
  %733 = vmatprep.subr.mxu0 0.0
  %734 = vmatpush1.msra.mxu0 0.0
  %735 = vmatprep.subr.mxu0 0.0
  %736 = vmatpush1.msra.mxu0 0.0
  %737 = vmatprep.subr.mxu0 0.0
  %738 = vmatpush1.msra.mxu0 0.0
  %739 = vmatprep.subr.mxu0 0.0
  %740 = vmatpush1.msra.mxu0 0.0
  %741 = vmatprep.subr.mxu0 0.0
  %742 = vmatpush1.msra.mxu0 0.0
  %743 = vmatprep.subr.mxu0 0.0
  %744 = vmatpush1.msra.mxu0 0.0
  %745 = vmatprep.subr.mxu0 0.0
  %746 = vmatpush1.msra.mxu0 0.0
  %747 = vmatprep.subr.mxu0 0.0
  %748 = vmatpush1.msra.mxu0 0.0
  %749 = vmatprep.subr.mxu0 0.0
  %750 = vmatpush1.msra.mxu0 0.0
  %751 = vmatprep.subr.mxu0 0.0
  %752 = vmatpush1.msra.mxu0 0.0
  %753 = vmatprep.subr.mxu0 0.0
  %754 = vmatpush1.msra.mxu0 0.0
  %755 = vmatprep.subr.mxu0 0.0
  %756 = vmatpush1.msra.mxu0 0.0
  %757 = vmatprep.subr.mxu0 0.0
  %758 = vmatpush1.msra.mxu0 0.0
  %759 = vmatprep.subr.mxu0 0.0
  %760 = vmatpush1.msra.mxu0 0.0
  %761 = vmatprep.mubr.f32.mxu0 0.0
  %762 = vmatmul.mubr.f32.gmra.mrb[0].mxu0 %v695
  %v763 = vpop.f32.mrb[0].mxu0
  %v764 = vadd.f32 0.0, %v763
  %v765 = vpop.f32.mrb[0].mxu0
  %766 = vdwg.mxu0
  %v768 = vrot.slane %v764, 6
  %v770 = vadd.f32 %v125, %v768
  %v771 = vxor.u32 %v770, 2147483648
  %v772 = vmul.f32 %v771, 1.442695
  %v773 = vpow.pop %v772
  %v774 = vadd.f32 %v773, 1.0
  %v775 = vrcp.pop %v774
  %v776 = vmul.f32 1.0, %v775
  %v777 = vadd.f32 %v764, %v220
  %v779 = vrot.slane %v777, 6
  %780 = vrot.lane.b32.xlu0 %v779, 64
  %v781 = vpop.permute.xlu0 %780
  %v783 = vmul.f32 %v776, %v781
  %785 = vrot.lane.b32.xlu0 %v783, 64
  %v786 = vpop.permute.xlu0 %785
  %v788 = vadd.f32 %v125, %v786
  %v789 = vtanh.pop %v788
  %v790 = vsub.f32 1.0, %v776
  %792 = vrot.lane.b32.xlu0 %v789, 96
  %v793 = vpop.permute.xlu0 %792
  %v795 = vmul.f32 %v790, %v793
  %v796 = vrot.slane %v689, 6
  %v798 = vmul.f32 %v776, %v796
  %v799 = vadd.f32 %v795, %v798
  %801 = vrot.lane.b32.xlu0 %v799, 96
  %v802 = vpop.permute.xlu0 %801
  %804 = vst.msk [vmem:[#allocation2 + $0x8] sm:$0xc] %vm357, %v802
  %v805 = vrot.slane %v799, 2
  %806 = vrot.lane.b32.xlu0 %v805, 96
  %v807 = vpop.permute.xlu0 %806
  %v808 = vsel %vm138, %v807, 0
  %810 = vmatprep.subr.mxu0 0.0
  %811 = vmatpush1.msra.mxu0 %v128
  %812 = vmatprep.subr.mxu0 0.0
  %813 = vmatpush1.msra.mxu0 %v129
  %814 = vmatprep.subr.mxu0 0.0
  %815 = vmatpush1.msra.mxu0 %v130
  %816 = vmatprep.subr.mxu0 0.0
  %817 = vmatpush1.msra.mxu0 %v131
  %818 = vmatprep.subr.mxu0 0.0
  %819 = vmatpush1.msra.mxu0 0.0
  %820 = vmatprep.subr.mxu0 0.0
  %821 = vmatpush1.msra.mxu0 0.0
  %822 = vmatprep.subr.mxu0 0.0
  %823 = vmatpush1.msra.mxu0 0.0
  %824 = vmatprep.subr.mxu0 0.0
  %825 = vmatpush1.msra.mxu0 0.0
  %826 = vmatprep.subr.mxu0 0.0
  %827 = vmatpush1.msra.mxu0 0.0
  %828 = vmatprep.subr.mxu0 0.0
  %829 = vmatpush1.msra.mxu0 0.0
  %830 = vmatprep.subr.mxu0 0.0
  %831 = vmatpush1.msra.mxu0 0.0
  %832 = vmatprep.subr.mxu0 0.0
  %833 = vmatpush1.msra.mxu0 0.0
  %834 = vmatprep.subr.mxu0 0.0
  %835 = vmatpush1.msra.mxu0 0.0
  %836 = vmatprep.subr.mxu0 0.0
  %837 = vmatpush1.msra.mxu0 0.0
  %838 = vmatprep.subr.mxu0 0.0
  %839 = vmatpush1.msra.mxu0 0.0
  %840 = vmatprep.subr.mxu0 0.0
  %841 = vmatpush1.msra.mxu0 0.0
  %842 = vmatprep.subr.mxu0 0.0
  %843 = vmatpush1.msra.mxu0 0.0
  %844 = vmatprep.subr.mxu0 0.0
  %845 = vmatpush1.msra.mxu0 0.0
  %846 = vmatprep.subr.mxu0 0.0
  %847 = vmatpush1.msra.mxu0 0.0
  %848 = vmatprep.subr.mxu0 0.0
  %849 = vmatpush1.msra.mxu0 0.0
  %850 = vmatprep.subr.mxu0 0.0
  %851 = vmatpush1.msra.mxu0 0.0
  %852 = vmatprep.subr.mxu0 0.0
  %853 = vmatpush1.msra.mxu0 0.0
  %854 = vmatprep.subr.mxu0 0.0
  %855 = vmatpush1.msra.mxu0 0.0
  %856 = vmatprep.subr.mxu0 0.0
  %857 = vmatpush1.msra.mxu0 0.0
  %858 = vmatprep.subr.mxu0 0.0
  %859 = vmatpush1.msra.mxu0 0.0
  %860 = vmatprep.subr.mxu0 0.0
  %861 = vmatpush1.msra.mxu0 0.0
  %862 = vmatprep.subr.mxu0 0.0
  %863 = vmatpush1.msra.mxu0 0.0
  %864 = vmatprep.subr.mxu0 0.0
  %865 = vmatpush1.msra.mxu0 0.0
  %866 = vmatprep.subr.mxu0 0.0
  %867 = vmatpush1.msra.mxu0 0.0
  %868 = vmatprep.subr.mxu0 0.0
  %869 = vmatpush1.msra.mxu0 0.0
  %870 = vmatprep.subr.mxu0 0.0
  %871 = vmatpush1.msra.mxu0 0.0
  %872 = vmatprep.subr.mxu0 0.0
  %873 = vmatpush1.msra.mxu0 0.0
  %874 = vmatprep.mubr.f32.mxu0 0.0
  %875 = vmatmul.mubr.f32.gmra.mrb[0].mxu0 %v808
  %v876 = vpop.f32.mrb[0].mxu0
  %v877 = vadd.f32 0.0, %v876
  %v878 = vpop.f32.mrb[0].mxu0
  %879 = vdwg.mxu0
  %v881 = vrot.slane %v877, 4
  %v883 = vadd.f32 %v125, %v881
  %v884 = vxor.u32 %v883, 2147483648
  %v885 = vmul.f32 %v884, 1.442695
  %v886 = vpow.pop %v885
  %v887 = vadd.f32 %v886, 1.0
  %v888 = vrcp.pop %v887
  %v889 = vmul.f32 1.0, %v888
  %v890 = vadd.f32 %v877, %v220
  %v892 = vrot.slane %v890, 4
  %893 = vrot.lane.b32.xlu0 %v892, 64
  %v894 = vpop.permute.xlu0 %893
  %v896 = vmul.f32 %v889, %v894
  %898 = vrot.lane.b32.xlu0 %v896, 64
  %v899 = vpop.permute.xlu0 %898
  %v901 = vadd.f32 %v125, %v899
  %v902 = vtanh.pop %v901
  %v903 = vsub.f32 1.0, %v889
  %905 = vrot.lane.b32.xlu0 %v902, 96
  %v906 = vpop.permute.xlu0 %905
  %v908 = vmul.f32 %v903, %v906
  %v909 = vrot.slane %v799, 6
  %v911 = vmul.f32 %v889, %v909
  %v912 = vadd.f32 %v908, %v911
  %914 = vrot.lane.b32.xlu0 %v912, 96
  %v915 = vpop.permute.xlu0 %914
  %917 = vst.msk [vmem:[#allocation2 + $0x8] sm:$0x30] %vm471, %v915
  %v918 = vrot.slane %v912, 4
  %919 = vrot.lane.b32.xlu0 %v918, 96
  %v920 = vpop.permute.xlu0 %919
  %v921 = vsel %vm138, %v920, 0
  %923 = vmatprep.subr.mxu0 0.0
  %924 = vmatpush1.msra.mxu0 %v128
  %925 = vmatprep.subr.mxu0 0.0
  %926 = vmatpush1.msra.mxu0 %v129
  %927 = vmatprep.subr.mxu0 0.0
  %928 = vmatpush1.msra.mxu0 %v130
  %929 = vmatprep.subr.mxu0 0.0
  %930 = vmatpush1.msra.mxu0 %v131
  %931 = vmatprep.subr.mxu0 0.0
  %932 = vmatpush1.msra.mxu0 0.0
  %933 = vmatprep.subr.mxu0 0.0
  %934 = vmatpush1.msra.mxu0 0.0
  %935 = vmatprep.subr.mxu0 0.0
  %936 = vmatpush1.msra.mxu0 0.0
  %937 = vmatprep.subr.mxu0 0.0
  %938 = vmatpush1.msra.mxu0 0.0
  %939 = vmatprep.subr.mxu0 0.0
  %940 = vmatpush1.msra.mxu0 0.0
  %941 = vmatprep.subr.mxu0 0.0
  %942 = vmatpush1.msra.mxu0 0.0
  %943 = vmatprep.subr.mxu0 0.0
  %944 = vmatpush1.msra.mxu0 0.0
  %945 = vmatprep.subr.mxu0 0.0
  %946 = vmatpush1.msra.mxu0 0.0
  %947 = vmatprep.subr.mxu0 0.0
  %948 = vmatpush1.msra.mxu0 0.0
  %949 = vmatprep.subr.mxu0 0.0
  %950 = vmatpush1.msra.mxu0 0.0
  %951 = vmatprep.subr.mxu0 0.0
  %952 = vmatpush1.msra.mxu0 0.0
  %953 = vmatprep.subr.mxu0 0.0
  %954 = vmatpush1.msra.mxu0 0.0
  %955 = vmatprep.subr.mxu0 0.0
  %956 = vmatpush1.msra.mxu0 0.0
  %957 = vmatprep.subr.mxu0 0.0
  %958 = vmatpush1.msra.mxu0 0.0
  %959 = vmatprep.subr.mxu0 0.0
  %960 = vmatpush1.msra.mxu0 0.0
  %961 = vmatprep.subr.mxu0 0.0
  %962 = vmatpush1.msra.mxu0 0.0
  %963 = vmatprep.subr.mxu0 0.0
  %964 = vmatpush1.msra.mxu0 0.0
  %965 = vmatprep.subr.mxu0 0.0
  %966 = vmatpush1.msra.mxu0 0.0
  %967 = vmatprep.subr.mxu0 0.0
  %968 = vmatpush1.msra.mxu0 0.0
  %969 = vmatprep.subr.mxu0 0.0
  %970 = vmatpush1.msra.mxu0 0.0
  %971 = vmatprep.subr.mxu0 0.0
  %972 = vmatpush1.msra.mxu0 0.0
  %973 = vmatprep.subr.mxu0 0.0
  %974 = vmatpush1.msra.mxu0 0.0
  %975 = vmatprep.subr.mxu0 0.0
  %976 = vmatpush1.msra.mxu0 0.0
  %977 = vmatprep.subr.mxu0 0.0
  %978 = vmatpush1.msra.mxu0 0.0
  %979 = vmatprep.subr.mxu0 0.0
  %980 = vmatpush1.msra.mxu0 0.0
  %981 = vmatprep.subr.mxu0 0.0
  %982 = vmatpush1.msra.mxu0 0.0
  %983 = vmatprep.subr.mxu0 0.0
  %984 = vmatpush1.msra.mxu0 0.0
  %985 = vmatprep.subr.mxu0 0.0
  %986 = vmatpush1.msra.mxu0 0.0
  %987 = vmatprep.mubr.f32.mxu0 0.0
  %988 = vmatmul.mubr.f32.gmra.mrb[0].mxu0 %v921
  %v989 = vpop.f32.mrb[0].mxu0
  %v990 = vadd.f32 0.0, %v989
  %v991 = vpop.f32.mrb[0].mxu0
  %992 = vdwg.mxu0
  %v994 = vrot.slane %v990, 2
  %v996 = vadd.f32 %v125, %v994
  %v997 = vxor.u32 %v996, 2147483648
  %v998 = vmul.f32 %v997, 1.442695
  %v999 = vpow.pop %v998
  %v1000 = vadd.f32 %v999, 1.0
  %v1001 = vrcp.pop %v1000
  %v1002 = vmul.f32 1.0, %v1001
  %v1003 = vadd.f32 %v990, %v220
  %v1005 = vrot.slane %v1003, 2
  %1006 = vrot.lane.b32.xlu0 %v1005, 64
  %v1007 = vpop.permute.xlu0 %1006
  %v1009 = vmul.f32 %v1002, %v1007
  %1011 = vrot.lane.b32.xlu0 %v1009, 64
  %v1012 = vpop.permute.xlu0 %1011
  %v1014 = vadd.f32 %v125, %v1012
  %v1015 = vtanh.pop %v1014
  %v1016 = vsub.f32 1.0, %v1002
  %1018 = vrot.lane.b32.xlu0 %v1015, 96
  %v1019 = vpop.permute.xlu0 %1018
  %v1021 = vmul.f32 %v1016, %v1019
  %v1022 = vrot.slane %v912, 6
  %v1024 = vmul.f32 %v1002, %v1022
  %v1025 = vadd.f32 %v1021, %v1024
  %1027 = vrot.lane.b32.xlu0 %v1025, 96
  %v1028 = vpop.permute.xlu0 %1027
  %1030 = vst.msk [vmem:[#allocation2 + $0x8] sm:$0xc0] %vm585, %v1028
  %v1031 = vld [vmem:[#allocation2] sm:$0xff]
  %v1032 = vld [vmem:[#allocation2 + $0x8] sm:$0xff]
  %v1033 = vld [vmem:[%s5] sm:$0xff]
  %v1034 = vld [vmem:[%s5 + $0x8] sm:$0xff]
  %v1035 = vld [vmem:[%s5 + $0x10] sm:$0xff]
  %v1036 = vld [vmem:[%s5 + $0x18] sm:$0xff]
  %v1037 = vld [vmem:[%s6] sm:$0x1]
  %v1039 = vlaneseq
  %v1040 = vshrl.u32 %v1039, 7
  %v1041 = vsub.s32 0, %v1040
  %v1042 = vrot.slane %v1037, %v1041
  %v1045 = vsel %vm138, %v1031, 0
  %v1048 = vsel %vm138, %v1032, 0
  %1050 = vmatprep.subr.mxu0 0.0
  %1051 = vmatpush1.msra.mxu0 %v1033
  %1052 = vmatprep.subr.mxu0 0.0
  %1053 = vmatpush1.msra.mxu0 %v1034
  %1054 = vmatprep.subr.mxu0 0.0
  %1055 = vmatpush1.msra.mxu0 %v1035
  %1056 = vmatprep.subr.mxu0 0.0
  %1057 = vmatpush1.msra.mxu0 %v1036
  %1058 = vmatprep.subr.mxu0 0.0
  %1059 = vmatpush1.msra.mxu0 0.0
  %1060 = vmatprep.subr.mxu0 0.0
  %1061 = vmatpush1.msra.mxu0 0.0
  %1062 = vmatprep.subr.mxu0 0.0
  %1063 = vmatpush1.msra.mxu0 0.0
  %1064 = vmatprep.subr.mxu0 0.0
  %1065 = vmatpush1.msra.mxu0 0.0
  %1066 = vmatprep.subr.mxu0 0.0
  %1067 = vmatpush1.msra.mxu0 0.0
  %1068 = vmatprep.subr.mxu0 0.0
  %1069 = vmatpush1.msra.mxu0 0.0
  %1070 = vmatprep.subr.mxu0 0.0
  %1071 = vmatpush1.msra.mxu0 0.0
  %1072 = vmatprep.subr.mxu0 0.0
  %1073 = vmatpush1.msra.mxu0 0.0
  %1074 = vmatprep.subr.mxu0 0.0
  %1075 = vmatpush1.msra.mxu0 0.0
  %1076 = vmatprep.subr.mxu0 0.0
  %1077 = vmatpush1.msra.mxu0 0.0
  %1078 = vmatprep.subr.mxu0 0.0
  %1079 = vmatpush1.msra.mxu0 0.0
  %1080 = vmatprep.subr.mxu0 0.0
  %1081 = vmatpush1.msra.mxu0 0.0
  %1082 = vmatprep.subr.mxu0 0.0
  %1083 = vmatpush1.msra.mxu0 0.0
  %1084 = vmatprep.subr.mxu0 0.0
  %1085 = vmatpush1.msra.mxu0 0.0
  %1086 = vmatprep.subr.mxu0 0.0
  %1087 = vmatpush1.msra.mxu0 0.0
  %1088 = vmatprep.subr.mxu0 0.0
  %1089 = vmatpush1.msra.mxu0 0.0
  %1090 = vmatprep.subr.mxu0 0.0
  %1091 = vmatpush1.msra.mxu0 0.0
  %1092 = vmatprep.subr.mxu0 0.0
  %1093 = vmatpush1.msra.mxu0 0.0
  %1094 = vmatprep.subr.mxu0 0.0
  %1095 = vmatpush1.msra.mxu0 0.0
  %1096 = vmatprep.subr.mxu0 0.0
  %1097 = vmatpush1.msra.mxu0 0.0
  %1098 = vmatprep.subr.mxu0 0.0
  %1099 = vmatpush1.msra.mxu0 0.0
  %1100 = vmatprep.subr.mxu0 0.0
  %1101 = vmatpush1.msra.mxu0 0.0
  %1102 = vmatprep.subr.mxu0 0.0
  %1103 = vmatpush1.msra.mxu0 0.0
  %1104 = vmatprep.subr.mxu0 0.0
  %1105 = vmatpush1.msra.mxu0 0.0
  %1106 = vmatprep.subr.mxu0 0.0
  %1107 = vmatpush1.msra.mxu0 0.0
  %1108 = vmatprep.subr.mxu0 0.0
  %1109 = vmatpush1.msra.mxu0 0.0
  %1110 = vmatprep.subr.mxu0 0.0
  %1111 = vmatpush1.msra.mxu0 0.0
  %1112 = vmatprep.subr.mxu0 0.0
  %1113 = vmatpush1.msra.mxu0 0.0
  %1114 = vmatprep.mubr.f32.mxu0 0.0
  %1115 = vmatmul.mubr.f32.gmra.mrb[0].mxu0 %v1045
  %v1116 = vpop.f32.mrb[0].mxu0
  %v1117 = vadd.f32 %v1042, %v1116
  %v1118 = vpop.f32.mrb[0].mxu0
  %1119 = vmatprep.mubr.f32.mxu0 0.0
  %1120 = vmatmul.mubr.f32.gmra.mrb[0].mxu0 %v1048
  %v1121 = vpop.f32.mrb[0].mxu0
  %v1122 = vadd.f32 %v1042, %v1121
  %v1123 = vpop.f32.mrb[0].mxu0
  %1124 = vdwg.mxu0
  %v1125 = vmax.f32 %v1117, 0.0
  %v1126 = vmax.f32 %v1122, 0.0
  %v1127 = vld [vmem:[%s7] sm:$0xff]
  %v1128 = vld [vmem:[%s7 + $0x8] sm:$0xff]
  %v1129 = vld [vmem:[%s7 + $0x10] sm:$0xff]
  %v1130 = vld [vmem:[%s7 + $0x18] sm:$0xff]
  %v1131 = vld [vmem:[%s7 + $0x20] sm:$0xff]
  %v1132 = vld [vmem:[%s7 + $0x28] sm:$0xff]
  %v1133 = vld [vmem:[%s7 + $0x30] sm:$0xff]
  %v1134 = vld [vmem:[%s7 + $0x38] sm:$0xff]
  %v1135 = vld [vmem:[%s8] sm:$0x1]
  %v1137 = vlaneseq
  %v1138 = vshrl.u32 %v1137, 7
  %v1139 = vsub.s32 0, %v1138
  %v1140 = vrot.slane %v1135, %v1139
  %vm1142 = vcmask 523264
  %v1144 = vsel %vm1142, %v1125, 0
  %v1147 = vsel %vm1142, %v1126, 0
  %1149 = vmatprep.subr.mxu0 0.0
  %1150 = vmatpush1.msra.mxu0 %v1127
  %1151 = vmatprep.subr.mxu0 0.0
  %1152 = vmatpush1.msra.mxu0 %v1128
  %1153 = vmatprep.subr.mxu0 0.0
  %1154 = vmatpush1.msra.mxu0 %v1129
  %1155 = vmatprep.subr.mxu0 0.0
  %1156 = vmatpush1.msra.mxu0 %v1130
  %1157 = vmatprep.subr.mxu0 0.0
  %1158 = vmatpush1.msra.mxu0 %v1131
  %1159 = vmatprep.subr.mxu0 0.0
  %1160 = vmatpush1.msra.mxu0 %v1132
  %1161 = vmatprep.subr.mxu0 0.0
  %1162 = vmatpush1.msra.mxu0 %v1133
  %1163 = vmatprep.subr.mxu0 0.0
  %1164 = vmatpush1.msra.mxu0 %v1134
  %1165 = vmatprep.subr.mxu0 0.0
  %1166 = vmatpush1.msra.mxu0 0.0
  %1167 = vmatprep.subr.mxu0 0.0
  %1168 = vmatpush1.msra.mxu0 0.0
  %1169 = vmatprep.subr.mxu0 0.0
  %1170 = vmatpush1.msra.mxu0 0.0
  %1171 = vmatprep.subr.mxu0 0.0
  %1172 = vmatpush1.msra.mxu0 0.0
  %1173 = vmatprep.subr.mxu0 0.0
  %1174 = vmatpush1.msra.mxu0 0.0
  %1175 = vmatprep.subr.mxu0 0.0
  %1176 = vmatpush1.msra.mxu0 0.0
  %1177 = vmatprep.subr.mxu0 0.0
  %1178 = vmatpush1.msra.mxu0 0.0
  %1179 = vmatprep.subr.mxu0 0.0
  %1180 = vmatpush1.msra.mxu0 0.0
  %1181 = vmatprep.subr.mxu0 0.0
  %1182 = vmatpush1.msra.mxu0 0.0
  %1183 = vmatprep.subr.mxu0 0.0
  %1184 = vmatpush1.msra.mxu0 0.0
  %1185 = vmatprep.subr.mxu0 0.0
  %1186 = vmatpush1.msra.mxu0 0.0
  %1187 = vmatprep.subr.mxu0 0.0
  %1188 = vmatpush1.msra.mxu0 0.0
  %1189 = vmatprep.subr.mxu0 0.0
  %1190 = vmatpush1.msra.mxu0 0.0
  %1191 = vmatprep.subr.mxu0 0.0
  %1192 = vmatpush1.msra.mxu0 0.0
  %1193 = vmatprep.subr.mxu0 0.0
  %1194 = vmatpush1.msra.mxu0 0.0
  %1195 = vmatprep.subr.mxu0 0.0
  %1196 = vmatpush1.msra.mxu0 0.0
  %1197 = vmatprep.subr.mxu0 0.0
  %1198 = vmatpush1.msra.mxu0 0.0
  %1199 = vmatprep.subr.mxu0 0.0
  %1200 = vmatpush1.msra.mxu0 0.0
  %1201 = vmatprep.subr.mxu0 0.0
  %1202 = vmatpush1.msra.mxu0 0.0
  %1203 = vmatprep.subr.mxu0 0.0
  %1204 = vmatpush1.msra.mxu0 0.0
  %1205 = vmatprep.subr.mxu0 0.0
  %1206 = vmatpush1.msra.mxu0 0.0
  %1207 = vmatprep.subr.mxu0 0.0
  %1208 = vmatpush1.msra.mxu0 0.0
  %1209 = vmatprep.subr.mxu0 0.0
  %1210 = vmatpush1.msra.mxu0 0.0
  %1211 = vmatprep.subr.mxu0 0.0
  %1212 = vmatpush1.msra.mxu0 0.0
  %1213 = vmatprep.mubr.f32.mxu0 0.0
  %1214 = vmatmul.mubr.f32.gmra.mrb[0].mxu0 %v1144
  %v1215 = vpop.f32.mrb[0].mxu0
  %v1216 = vadd.f32 %v1140, %v1215
  %v1217 = vpop.f32.mrb[0].mxu0
  %1218 = vmatprep.mubr.f32.mxu0 0.0
  %1219 = vmatmul.mubr.f32.gmra.mrb[0].mxu0 %v1147
  %v1220 = vpop.f32.mrb[0].mxu0
  %v1221 = vadd.f32 %v1140, %v1220
  %v1222 = vpop.f32.mrb[0].mxu0
  %1223 = vdwg.mxu0
  %1224 = vst [vmem:[%s9] sm:$0xff] %v1216
  %1225 = vst [vmem:[%s9 + $0x8] sm:$0xff] %v1221
  // Predicated region
  $region38: #{grumlp_forward.1} parent=0 // pred_check
    _
  $region39: #{grumlp_forward.1} parent=0 // pred_check_branch
    %1227 = sbr.rel (0) target = $region41
  $region40: #{grumlp_forward.1} parent=0 // pred_region
    _
  $region41: #{grumlp_forward.1} parent=0 // pred_fallthru
    _
  // Predicated region
  $region42: #{grumlp_forward.1} parent=0 // pred_check
    _
  $region43: #{grumlp_forward.1} parent=0 // pred_check_branch
    %1229 = sbr.rel (0) target = $region45
  $region44: #{grumlp_forward.1} parent=0 // pred_region
    _
  $region45: #{grumlp_forward.1} parent=0 // pred_fallthru
    _

</llo_original>
